<compile_context>
chip_gen: v6e
topology: v6e:2x2x1
jax: 0.10.0
libtpu: 0.0.40
codegen_flags: <defaults>
</compile_context>

<pallas_src>
from collections import namedtuple

import numpy as np
import jax
import jax.numpy as jnp
from jax import lax
from jax.experimental import pallas as pl
from jax.experimental.pallas import tpu as pltpu

Genotype = namedtuple("Genotype", "reduce reduce_concat up up_concat")

BN_EPS = 1e-5


# ---------------------------------------------------------------------------
# Parameter construction (deterministic, synthetic)
# ---------------------------------------------------------------------------
def _make_preprocess_params(key, c_in, c_out, affine):
    kw, kg, kb = jax.random.split(key, 3)
    # Conv2d(c_in, c_out, 1, bias=False) weight stored as (Cin, Cout) for matmul.
    w = jax.random.normal(kw, (c_in, c_out), jnp.float32) / jnp.sqrt(float(c_in))
    if affine:
        gamma = 1.0 + 0.1 * jax.random.normal(kg, (1, c_out), jnp.float32)
        beta = 0.1 * jax.random.normal(kb, (1, c_out), jnp.float32)
    else:
        gamma = jnp.ones((1, c_out), jnp.float32)
        beta = jnp.zeros((1, c_out), jnp.float32)
    # BatchNorm2d eval defaults: running_mean=0, running_var=1 -> fold the BN
    # scale straight into the conv weight, keep only the additive shift.
    scale = gamma / jnp.sqrt(1.0 + BN_EPS)
    w_folded = w * scale          # (Cin, Cout) * (1, Cout)
    shift = beta                  # (1, Cout)
    return w_folded, shift


# ---------------------------------------------------------------------------
# Fused cell kernel (built per genotype / shape; one pallas_call per forward)
# ---------------------------------------------------------------------------
def _build_cell_kernel(*, BR, Wo, C, op_names, indices, concat, cell_class):
    # BR = B_blk * Ho * Wo rows per pooling "phase"; the scratch holds
    # 2 states x 4 phases = 8*BR rows of C channels.
    BR4 = 4 * BR
    steps = len(op_names) // 2

    # Which pooled outputs each preprocessed state (idx < 2) must provide.
    need = {}
    for name, idx in zip(op_names, indices):
        stride = 2 if (abs(cell_class) == 1 and idx < 2) else 1
        if idx < 2:
            if stride != 2:
                # TODO(synk): stride-1 ops on a full-resolution preprocessed state.
                raise NotImplementedError((name, idx, stride))
            if name == "max_pool_3x3":
                need.setdefault(idx, set()).add("max")
            elif name == "avg_pool_3x3":
                need.setdefault(idx, set()).add("avg")
            else:
                # TODO(synk): skip_connect stride-2 (FactorizedReduce) and
                # sep_conv / dil_conv DARTS ops are not implemented.
                raise NotImplementedError(name)
    if any(idx < 2 for idx in concat):
        # TODO(synk): concat of a full-resolution preprocessed state.
        raise NotImplementedError("concat index < 2")

    def kernel(x0_ref, x1_ref, w0_ref, sh0_ref, w1_ref, sh1_ref, m_ref,
               o_ref, y_scr):
        # ---- preprocess: ReLU -> 1x1 conv (BN scale pre-folded) -> +shift ----
        y0 = jnp.dot(jnp.maximum(x0_ref[...], 0.0), w0_ref[...],
                     preferred_element_type=jnp.float32) + sh0_ref[...]
        y_scr[0:BR4, :] = y0
        y1 = jnp.dot(jnp.maximum(x1_ref[...], 0.0), w1_ref[...],
                     preferred_element_type=jnp.float32) + sh1_ref[...]
        y_scr[BR4:2 * BR4, :] = y1

        # Boundary masks / avg-pool reciprocal tap count (per output pixel).
        ew = jnp.broadcast_to(m_ref[:, 0:1], (BR, C)) > 0.5     # ow == 0
        eh = jnp.broadcast_to(m_ref[:, 1:2], (BR, C)) > 0.5     # oh == 0
        ehw = jnp.logical_or(ew, eh)
        invc = jnp.broadcast_to(m_ref[:, 2:3], (BR, C))         # 1 / #valid taps

        def pool_3x3_s2(base, want_max, want_avg):
            # Phase sub-blocks (rows ordered (image-in-block, oh, ow)):
            #   E = x[2oh, 2ow]      A = x[2oh,   2ow+1]
            #   B = x[2oh+1, 2ow]    D = x[2oh+1, 2ow+1]
            # Each tap is loaded exactly once and feeds both max and sum.
            E    = y_scr[base          : base + 1 * BR, :]
            A    = y_scr[base + 1 * BR : base + 2 * BR, :]
            B_   = y_scr[base + 2 * BR : base + 3 * BR, :]
            D    = y_scr[base + 3 * BR : base + 4 * BR, :]
            A_l  = y_scr[base + 1 * BR - 1      : base + 2 * BR - 1, :]       # x[2oh,  2ow-1]
            B_u  = y_scr[base + 2 * BR - Wo     : base + 3 * BR - Wo, :]      # x[2oh-1,2ow  ]
            D_l  = y_scr[base + 3 * BR - 1      : base + 4 * BR - 1, :]       # x[2oh+1,2ow-1]
            D_u  = y_scr[base + 3 * BR - Wo     : base + 4 * BR - Wo, :]      # x[2oh-1,2ow+1]
            D_ul = y_scr[base + 3 * BR - Wo - 1 : base + 4 * BR - Wo - 1, :]  # x[2oh-1,2ow-1]
            mx = av = None
            if want_max:
                # Out-of-image taps are replaced by the window centre E
                # (a no-op for max) via a single vselect per edge tap.
                mx = jnp.maximum(jnp.maximum(E, A), jnp.maximum(B_, D))
                mx = jnp.maximum(mx, jnp.where(ew, E, A_l))
                mx = jnp.maximum(mx, jnp.where(ew, E, D_l))
                mx = jnp.maximum(mx, jnp.where(eh, E, B_u))
                mx = jnp.maximum(mx, jnp.where(eh, E, D_u))
                mx = jnp.maximum(mx, jnp.where(ehw, E, D_ul))
            if want_avg:
                # Out-of-image taps contribute 0 (count_include_pad=False).
                sm = (E + A + B_ + D
                      + jnp.where(ew, 0.0, A_l) + jnp.where(ew, 0.0, D_l)
                      + jnp.where(eh, 0.0, B_u) + jnp.where(eh, 0.0, D_u)
                      + jnp.where(ehw, 0.0, D_ul))
                av = sm * invc
            return mx, av

        # Pool each needed preprocessed state ONCE (max & avg share the taps).
        pooled = {idx: pool_3x3_s2(idx * BR4, "max" in kinds, "avg" in kinds)
                  for idx, kinds in sorted(need.items(), key=lambda kv: kv[0])}

        states = [None, None]   # states[0]/[1] only exist via pooled[] results

        def op_value(name, idx, stride):
            if idx < 2:
                mx, av = pooled[idx]
                return mx if name == "max_pool_3x3" else av
            if name == "skip_connect" and stride == 1:
                return states[idx]
            # TODO(synk): stride-1 pools / DARTS conv ops on intermediate states.
            raise NotImplementedError((name, idx, stride))

        for i in range(steps):
            i1, i2 = indices[2 * i], indices[2 * i + 1]
            st1 = 2 if (abs(cell_class) == 1 and i1 < 2) else 1
            st2 = 2 if (abs(cell_class) == 1 and i2 < 2) else 1
            h1 = op_value(op_names[2 * i], i1, st1)
            h2 = op_value(op_names[2 * i + 1], i2, st2)
            states.append(h1 + h2)

        # Lane-dense concat: one (BR, K*C) store instead of K masked C-wide stores.
        o_ref[...] = jnp.concatenate([states[idx] for idx in concat], axis=-1)

    return kernel


def _pick_batch_block(N, R, Cin, C, K, in_itemsize):
    """Choose how many images to process per grid step."""
    # Per-image per-step VMEM footprint (Pallas double-buffers inputs/outputs).
    per_img = (2 * 2 * 4 * R * Cin * in_itemsize   # s0 + s1 rows, double-buffered
               + 2 * R * K * C * 4                 # output block, double-buffered
               + 8 * R * C * 4                     # y_scr scratch
               + 2 * R * 128 * 4)                  # packed masks (lane-padded tile)
    cap = max(1, (8 * 2 ** 20) // per_img)         # ~8 MiB/step: safe on v7x 64 MiB VMEM
    divs = [d for d in range(1, N + 1) if N % d == 0]
    # Keep block second-minor dims sublane(8)-aligned unless the block is full-extent.
    ok = [d for d in divs if (d * R) % 8 == 0 or d == N] or [N]
    # Amortize the ~0.35us/step grid overhead: target >= 512 rows per step.
    target = next((d for d in ok if d * 8 * R >= 512), ok[-1])
    candidates = [d for d in ok if d <= min(target, cap)]
    b = max(candidates) if candidates else min(ok)
    # Prefer a grid of length >= 2 so v7x's two TensorCores both get work.
    if N // b < 2:
        smaller = [d for d in ok if d < b]
        if smaller:
            b = smaller[-1]
    return b, per_img


# ---------------------------------------------------------------------------
# The Cell (public wrapper; NCHW in / NCHW out like the PyTorch module)
# ---------------------------------------------------------------------------
class CellPallas:
    def __init__(self, key, genotype, C_prev_prev, C_prev, C, cell_class,
                 downsamp_prev, mxu_dtype=jnp.float32):
        self.cell_class = cell_class
        self.C = C
        # bf16 MXU operands halve input DMA on v6e/v7x; keep f32 on v5e (no
        # bf16 VPU/EUP datapath) or when exact f32 matching matters.
        self.mxu_dtype = mxu_dtype
        k0, k1 = jax.random.split(key)
        if downsamp_prev == -1 and cell_class == -1:
            # TODO(synk): FactorizedReduce preprocess0 not implemented (unused here).
            raise NotImplementedError("FactorizedReduce preprocess0")
        elif downsamp_prev == 0 or cell_class == 1:
            self.pre0 = _make_preprocess_params(k0, C_prev, C, affine=False)
        self.pre1 = _make_preprocess_params(k1, C_prev, C, affine=True)

        if cell_class == -1:
            op_names, indices = zip(*genotype.reduce)
            concat = genotype.reduce_concat
        elif cell_class == 1:
            op_names, indices = zip(*genotype.up)
            concat = genotype.up_concat
        assert len(op_names) == len(indices)
        self._steps = len(op_names) // 2
        self._concat = list(concat)
        self.multiplier = len(self._concat)
        self._op_names = op_names
        self._indices = indices

    # ---- layout helpers ----------------------------------------------------
    @staticmethod
    def _pack_rows(x_nhwc, Ho, Wo, B_blk, dtype):
        # NHWC -> rows ordered (batch-block, phase=(rh,rw), image-in-block, oh, ow)
        # so every stride-2 pooling tap is ONE contiguous row slice of the whole
        # batch block inside the kernel.
        N, H, W, Cin = x_nhwc.shape
        x = x_nhwc.reshape(N, Ho, 2, Wo, 2, Cin)
        x = jnp.transpose(x, (0, 2, 4, 1, 3, 5))             # (N, rh, rw, Ho, Wo, C)
        G = N // B_blk
        x = x.reshape(G, B_blk, 4, Ho * Wo, Cin)
        x = jnp.transpose(x, (0, 2, 1, 3, 4))                # (G, phase, b, p, C)
        return x.reshape(N * 4 * Ho * Wo, Cin).astype(dtype)

    @staticmethod
    def _edge_masks(Ho, Wo, B_blk):
        R = Ho * Wo
        ew = np.zeros((Ho, Wo), np.float32); ew[:, 0] = 1.0          # ow == 0
        eh = np.zeros((Ho, Wo), np.float32); eh[0, :] = 1.0          # oh == 0
        rows_valid = np.full((Ho,), 3.0, np.float32); rows_valid[0] = 2.0
        cols_valid = np.full((Wo,), 3.0, np.float32); cols_valid[0] = 2.0
        invc = (1.0 / np.outer(rows_valid, cols_valid)).astype(np.float32)
        m = np.stack([ew.reshape(R), eh.reshape(R), invc.reshape(R)], axis=1)
        return jnp.asarray(np.tile(m, (B_blk, 1)))                   # (B_blk*R, 3)

    # ---- channels-last entry point (use this between stacked cells) --------
    def forward_nhwc(self, s0_nhwc, s1_nhwc):
        N, H, W, Cin = s1_nhwc.shape
        assert s0_nhwc.shape == s1_nhwc.shape
        assert H % 2 == 0 and W % 2 == 0
        Ho, Wo, C, K = H // 2, W // 2, self.C, self.multiplier
        R = Ho * Wo
        in_itemsize = np.dtype(self.mxu_dtype).itemsize
        B_blk, per_img = _pick_batch_block(N, R, Cin, C, K, in_itemsize)
        G = N // B_blk
        BR = B_blk * R
        assert BR % 8 == 0 or G == 1, "need B_blk*Ho*Wo % 8 == 0 (or one grid step)"

        x0 = self._pack_rows(s0_nhwc, Ho, Wo, B_blk, self.mxu_dtype)   # (N*4R, Cin)
        x1 = self._pack_rows(s1_nhwc, Ho, Wo, B_blk, self.mxu_dtype)
        masks = self._edge_masks(Ho, Wo, B_blk)                        # (BR, 3)

        w0, sh0 = self.pre0
        w1, sh1 = self.pre1
        w0 = w0.astype(self.mxu_dtype)
        w1 = w1.astype(self.mxu_dtype)

        kernel = _build_cell_kernel(
            BR=BR, Wo=Wo, C=C, op_names=self._op_names,
            indices=self._indices, concat=self._concat,
            cell_class=self.cell_class)

        vmem_limit = int(min(64 * 2 ** 20, max(32 * 2 ** 20, 2 * B_blk * per_img)))
        cost = pl.CostEstimate(
            flops=2 * 2 * N * 4 * R * Cin * C,
            transcendentals=0,
            bytes_accessed=(2 * N * 4 * R * Cin * in_itemsize
                            + N * R * K * C * 4
                            + 2 * Cin * C * in_itemsize + 2 * C * 4 + BR * 3 * 4))

        out = pl.pallas_call(
            kernel,
            out_shape=jax.ShapeDtypeStruct((N * R, K * C), jnp.float32),
            grid=(G,),
            in_specs=[
                pl.BlockSpec((4 * BR, Cin), lambda n: (n, 0)),   # s0 rows
                pl.BlockSpec((4 * BR, Cin), lambda n: (n, 0)),   # s1 rows
                pl.BlockSpec((Cin, C), lambda n: (0, 0)),        # w0 (scale folded)
                pl.BlockSpec((1, C), lambda n: (0, 0)),          # shift0
                pl.BlockSpec((Cin, C), lambda n: (0, 0)),        # w1 (scale folded)
                pl.BlockSpec((1, C), lambda n: (0, 0)),          # shift1
                pl.BlockSpec((BR, 3), lambda n: (0, 0)),         # packed masks
            ],
            out_specs=pl.BlockSpec((BR, K * C), lambda n: (n, 0)),
            scratch_shapes=[pltpu.VMEM((8 * BR, C), jnp.float32)],
            compiler_params=pltpu.CompilerParams(
                dimension_semantics=("parallel",),
                vmem_limit_bytes=vmem_limit),
            cost_estimate=cost,
        )(x0, x1, w0, sh0, w1, sh1, masks)

        # Rows of `out` are image-major: reshape straight to channels-last.
        return out.reshape(N, Ho, Wo, K * C)

    # ---- NCHW-compatible entry point (network boundary only) ---------------
    def __call__(self, s0_nchw, s1_nchw):
        s0 = jnp.transpose(s0_nchw, (0, 2, 3, 1))
        s1 = jnp.transpose(s1_nchw, (0, 2, 3, 1))
        out = self.forward_nhwc(s0, s1)
        return jnp.transpose(out, (0, 3, 1, 2))       # (N, K*C, Ho, Wo)


# ---------------------------------------------------------------------------
# Pure-JAX (XLA) reference of the same forward, used only for a sanity check.
# ---------------------------------------------------------------------------
def _reference_cell(cell, s0_nchw, s1_nchw):
    def rcbn(x_nchw, params):
        w, shift = params
        x = jnp.maximum(jnp.transpose(x_nchw, (0, 2, 3, 1)).astype(jnp.float32), 0.0)
        y = jnp.einsum("nhwc,cd->nhwd", x, w.astype(jnp.float32),
                       precision=lax.Precision.HIGHEST)
        return y + shift.reshape(1, 1, 1, -1)

    pad = ((0, 0), (1, 1), (1, 1), (0, 0))

    def maxpool(x):
        return lax.reduce_window(x, -jnp.inf, lax.max,
                                 (1, 3, 3, 1), (1, 2, 2, 1), pad)

    def avgpool(x):
        s = lax.reduce_window(x, 0.0, lax.add, (1, 3, 3, 1), (1, 2, 2, 1), pad)
        c = lax.reduce_window(jnp.ones_like(x[..., :1]), 0.0, lax.add,
                              (1, 3, 3, 1), (1, 2, 2, 1), pad)
        return s / c

    ops = {"max_pool_3x3": maxpool, "avg_pool_3x3": avgpool,
           "skip_connect": lambda x: x}
    states = [rcbn(s0_nchw, cell.pre0), rcbn(s1_nchw, cell.pre1)]
    for i in range(cell._steps):
        h1 = ops[cell._op_names[2 * i]](states[cell._indices[2 * i]])
        h2 = ops[cell._op_names[2 * i + 1]](states[cell._indices[2 * i + 1]])
        states.append(h1 + h2)
    out = jnp.concatenate([states[i] for i in cell._concat], axis=-1)
    return jnp.transpose(out, (0, 3, 1, 2))


if __name__ == "__main__":
    key = jax.random.PRNGKey(0)
    k_s0, k_s1, k_params = jax.random.split(key, 3)

    N, C_prev, C, H, W = 2, 8, 8, 16, 16
    s0 = jax.random.normal(k_s0, (N, C_prev, H, W), jnp.float32)
    s1 = jax.random.normal(k_s1, (N, C_prev, H, W), jnp.float32)

    genotype = Genotype(
        reduce=[("max_pool_3x3", 0), ("avg_pool_3x3", 1),
                ("skip_connect", 2), ("max_pool_3x3", 1)],
        reduce_concat=[2, 3],
        up=[("max_pool_3x3", 0), ("avg_pool_3x3", 1),
            ("skip_connect", 2), ("max_pool_3x3", 1)],
        up_concat=[2, 3],
    )

    cell = CellPallas(k_params, genotype,
                      C_prev_prev=C_prev, C_prev=C_prev, C=C,
                      cell_class=-1, downsamp_prev=0,
                      mxu_dtype=jnp.float32)   # set jnp.bfloat16 on v6e/v7x

    forward = jax.jit(cell)
    out = jax.block_until_ready(forward(s0, s1))

    assert out.shape == (N, cell.multiplier * C, H // 2, W // 2), out.shape
    assert bool(jnp.all(jnp.isfinite(out)))

    ref = jax.block_until_ready(_reference_cell(cell, s0, s1))
    max_err = float(jnp.max(jnp.abs(out - ref)))
    assert max_err < 5e-2, max_err

    print("KERNEL_OK")
</pallas_src>

<mosaic_0001>
module attributes {stable_mosaic.version = 11 : i64} {
  func.func @kernel(%arg0: i32, %arg1: memref<256x8xf32, #tpu.memory_space<vmem>>, %arg2: memref<256x8xf32, #tpu.memory_space<vmem>>, %arg3: memref<8x8xf32, #tpu.memory_space<vmem>>, %arg4: memref<1x8xf32, #tpu.memory_space<vmem>>, %arg5: memref<8x8xf32, #tpu.memory_space<vmem>>, %arg6: memref<1x8xf32, #tpu.memory_space<vmem>>, %arg7: memref<64x3xf32, #tpu.memory_space<vmem>>, %arg8: memref<64x16xf32, #tpu.memory_space<vmem>>, %arg9: memref<512x8xf32, #tpu.memory_space<vmem>>) attributes {dimension_semantics = [#tpu.dimension_semantics<parallel>], iteration_bounds = array<i64: 2>, scalar_prefetch = 0 : i64, scratch_operands = 1 : i64, tpu.core_type = #tpu.core_type<tc>, window_params = [{transform_indices = @transform_0, window_bounds = array<i64: 256, 8>}, {transform_indices = @transform_1, window_bounds = array<i64: 256, 8>}, {pipeline_mode = #tpu.pipeline_mode<synchronous>, transform_indices = @transform_2, window_bounds = array<i64: 8, 8>}, {pipeline_mode = #tpu.pipeline_mode<synchronous>, transform_indices = @transform_3, window_bounds = array<i64: 1, 8>}, {pipeline_mode = #tpu.pipeline_mode<synchronous>, transform_indices = @transform_4, window_bounds = array<i64: 8, 8>}, {pipeline_mode = #tpu.pipeline_mode<synchronous>, transform_indices = @transform_5, window_bounds = array<i64: 1, 8>}, {pipeline_mode = #tpu.pipeline_mode<synchronous>, transform_indices = @transform_6, window_bounds = array<i64: 64, 3>}, {transform_indices = @transform_7, window_bounds = array<i64: 64, 16>}]} {
    %c0 = arith.constant 0 : index
    %c0_0 = arith.constant 0 : index
    %0 = vector.load %arg1[%c0, %c0_0] : memref<256x8xf32, #tpu.memory_space<vmem>>, vector<256x8xf32>
    %cst = arith.constant 0.000000e+00 : f32
    %1 = vector.broadcast %cst : f32 to vector<256x8xf32>
    %2 = arith.maximumf %0, %1 : vector<256x8xf32>
    %c0_1 = arith.constant 0 : index
    %c0_2 = arith.constant 0 : index
    %3 = vector.load %arg3[%c0_1, %c0_2] : memref<8x8xf32, #tpu.memory_space<vmem>>, vector<8x8xf32>
    %cst_3 = arith.constant dense<0.000000e+00> : vector<256x8xf32>
    %4 = tpu.matmul %2, %3, %cst_3 {dimension_numbers = #tpu.dot_dimension_numbers<[1], [0], [0], [1], [0, 0, 1, 1], [], []>} : vector<256x8xf32>, vector<8x8xf32>, vector<256x8xf32> -> vector<256x8xf32>
    %c0_4 = arith.constant 0 : index
    %c0_5 = arith.constant 0 : index
    %5 = vector.load %arg4[%c0_4, %c0_5] : memref<1x8xf32, #tpu.memory_space<vmem>>, vector<1x8xf32>
    %6 = vector.broadcast %5 : vector<1x8xf32> to vector<256x8xf32>
    %7 = arith.addf %4, %6 : vector<256x8xf32>
    %c0_6 = arith.constant 0 : index
    %c0_7 = arith.constant 0 : index
    %8 = vector.load %arg9[%c0_6, %c0_7] : memref<512x8xf32, #tpu.memory_space<vmem>>, vector<256x8xf32>
    tpu.vector_store %arg9[%c0_6, %c0_7], %7 {strides = array<i32>} : memref<512x8xf32, #tpu.memory_space<vmem>>, vector<256x8xf32>,
    %c0_8 = arith.constant 0 : index
    %c0_9 = arith.constant 0 : index
    %9 = vector.load %arg2[%c0_8, %c0_9] : memref<256x8xf32, #tpu.memory_space<vmem>>, vector<256x8xf32>
    %cst_10 = arith.constant 0.000000e+00 : f32
    %10 = vector.broadcast %cst_10 : f32 to vector<256x8xf32>
    %11 = arith.maximumf %9, %10 : vector<256x8xf32>
    %c0_11 = arith.constant 0 : index
    %c0_12 = arith.constant 0 : index
    %12 = vector.load %arg5[%c0_11, %c0_12] : memref<8x8xf32, #tpu.memory_space<vmem>>, vector<8x8xf32>
    %cst_13 = arith.constant dense<0.000000e+00> : vector<256x8xf32>
    %13 = tpu.matmul %11, %12, %cst_13 {dimension_numbers = #tpu.dot_dimension_numbers<[1], [0], [0], [1], [0, 0, 1, 1], [], []>} : vector<256x8xf32>, vector<8x8xf32>, vector<256x8xf32> -> vector<256x8xf32>
    %c0_14 = arith.constant 0 : index
    %c0_15 = arith.constant 0 : index
    %14 = vector.load %arg6[%c0_14, %c0_15] : memref<1x8xf32, #tpu.memory_space<vmem>>, vector<1x8xf32>
    %15 = vector.broadcast %14 : vector<1x8xf32> to vector<256x8xf32>
    %16 = arith.addf %13, %15 : vector<256x8xf32>
    %c256 = arith.constant 256 : index
    %c0_16 = arith.constant 0 : index
    %17 = vector.load %arg9[%c256, %c0_16] : memref<512x8xf32, #tpu.memory_space<vmem>>, vector<256x8xf32>
    tpu.vector_store %arg9[%c256, %c0_16], %16 {strides = array<i32>} : memref<512x8xf32, #tpu.memory_space<vmem>>, vector<256x8xf32>,
    %c0_17 = arith.constant 0 : index
    %c0_18 = arith.constant 0 : index
    %18 = vector.load %arg7[%c0_17, %c0_18] : memref<64x3xf32, #tpu.memory_space<vmem>>, vector<64x1xf32>
    %19 = vector.shape_cast %18 : vector<64x1xf32> to vector<64x1xf32>
    %20 = vector.broadcast %19 : vector<64x1xf32> to vector<64x8xf32>
    %cst_19 = arith.constant 5.000000e-01 : f32
    %21 = vector.broadcast %cst_19 : f32 to vector<64x8xf32>
    %22 = arith.cmpf ogt, %20, %21 : vector<64x8xf32>
    %c0_20 = arith.constant 0 : index
    %c1 = arith.constant 1 : index
    %23 = vector.load %arg7[%c0_20, %c1] : memref<64x3xf32, #tpu.memory_space<vmem>>, vector<64x1xf32>
    %24 = vector.shape_cast %23 : vector<64x1xf32> to vector<64x1xf32>
    %25 = vector.broadcast %24 : vector<64x1xf32> to vector<64x8xf32>
    %cst_21 = arith.constant 5.000000e-01 : f32
    %26 = vector.broadcast %cst_21 : f32 to vector<64x8xf32>
    %27 = arith.cmpf ogt, %25, %26 : vector<64x8xf32>
    %28 = arith.ori %22, %27 : vector<64x8xi1>
    %c0_22 = arith.constant 0 : index
    %c2 = arith.constant 2 : index
    %29 = vector.load %arg7[%c0_22, %c2] : memref<64x3xf32, #tpu.memory_space<vmem>>, vector<64x1xf32>
    %30 = vector.shape_cast %29 : vector<64x1xf32> to vector<64x1xf32>
    %31 = vector.broadcast %30 : vector<64x1xf32> to vector<64x8xf32>
    %c0_23 = arith.constant 0 : index
    %c0_24 = arith.constant 0 : index
    %32 = vector.load %arg9[%c0_23, %c0_24] : memref<512x8xf32, #tpu.memory_space<vmem>>, vector<64x8xf32>
    %c64 = arith.constant 64 : index
    %c0_25 = arith.constant 0 : index
    %33 = vector.load %arg9[%c64, %c0_25] : memref<512x8xf32, #tpu.memory_space<vmem>>, vector<64x8xf32>
    %c128 = arith.constant 128 : index
    %c0_26 = arith.constant 0 : index
    %34 = vector.load %arg9[%c128, %c0_26] : memref<512x8xf32, #tpu.memory_space<vmem>>, vector<64x8xf32>
    %c192 = arith.constant 192 : index
    %c0_27 = arith.constant 0 : index
    %35 = vector.load %arg9[%c192, %c0_27] : memref<512x8xf32, #tpu.memory_space<vmem>>, vector<64x8xf32>
    %c63 = arith.constant 63 : index
    %c0_28 = arith.constant 0 : index
    %36 = vector.load %arg9[%c63, %c0_28] : memref<512x8xf32, #tpu.memory_space<vmem>>, vector<64x8xf32>
    %c120 = arith.constant 120 : index
    %c0_29 = arith.constant 0 : index
    %37 = vector.load %arg9[%c120, %c0_29] : memref<512x8xf32, #tpu.memory_space<vmem>>, vector<64x8xf32>
    %c191 = arith.constant 191 : index
    %c0_30 = arith.constant 0 : index
    %38 = vector.load %arg9[%c191, %c0_30] : memref<512x8xf32, #tpu.memory_space<vmem>>, vector<64x8xf32>
    %c184 = arith.constant 184 : index
    %c0_31 = arith.constant 0 : index
    %39 = vector.load %arg9[%c184, %c0_31] : memref<512x8xf32, #tpu.memory_space<vmem>>, vector<64x8xf32>
    %c183 = arith.constant 183 : index
    %c0_32 = arith.constant 0 : index
    %40 = vector.load %arg9[%c183, %c0_32] : memref<512x8xf32, #tpu.memory_space<vmem>>, vector<64x8xf32>
    %41 = arith.maximumf %32, %33 : vector<64x8xf32>
    %42 = arith.maximumf %34, %35 : vector<64x8xf32>
    %43 = arith.maximumf %41, %42 : vector<64x8xf32>
    %44 = arith.select %22, %32, %36 : vector<64x8xi1>, vector<64x8xf32>
    %45 = arith.maximumf %43, %44 : vector<64x8xf32>
    %46 = arith.select %22, %32, %38 : vector<64x8xi1>, vector<64x8xf32>
    %47 = arith.maximumf %45, %46 : vector<64x8xf32>
    %48 = arith.select %27, %32, %37 : vector<64x8xi1>, vector<64x8xf32>
    %49 = arith.maximumf %47, %48 : vector<64x8xf32>
    %50 = arith.select %27, %32, %39 : vector<64x8xi1>, vector<64x8xf32>
    %51 = arith.maximumf %49, %50 : vector<64x8xf32>
    %52 = arith.select %28, %32, %40 : vector<64x8xi1>, vector<64x8xf32>
    %53 = arith.maximumf %51, %52 : vector<64x8xf32>
    %c256_33 = arith.constant 256 : index
    %c0_34 = arith.constant 0 : index
    %54 = vector.load %arg9[%c256_33, %c0_34] : memref<512x8xf32, #tpu.memory_space<vmem>>, vector<64x8xf32>
    %c320 = arith.constant 320 : index
    %c0_35 = arith.constant 0 : index
    %55 = vector.load %arg9[%c320, %c0_35] : memref<512x8xf32, #tpu.memory_space<vmem>>, vector<64x8xf32>
    %c384 = arith.constant 384 : index
    %c0_36 = arith.constant 0 : index
    %56 = vector.load %arg9[%c384, %c0_36] : memref<512x8xf32, #tpu.memory_space<vmem>>, vector<64x8xf32>
    %c448 = arith.constant 448 : index
    %c0_37 = arith.constant 0 : index
    %57 = vector.load %arg9[%c448, %c0_37] : memref<512x8xf32, #tpu.memory_space<vmem>>, vector<64x8xf32>
    %c319 = arith.constant 319 : index
    %c0_38 = arith.constant 0 : index
    %58 = vector.load %arg9[%c319, %c0_38] : memref<512x8xf32, #tpu.memory_space<vmem>>, vector<64x8xf32>
    %c376 = arith.constant 376 : index
    %c0_39 = arith.constant 0 : index
    %59 = vector.load %arg9[%c376, %c0_39] : memref<512x8xf32, #tpu.memory_space<vmem>>, vector<64x8xf32>
    %c447 = arith.constant 447 : index
    %c0_40 = arith.constant 0 : index
    %60 = vector.load %arg9[%c447, %c0_40] : memref<512x8xf32, #tpu.memory_space<vmem>>, vector<64x8xf32>
    %c440 = arith.constant 440 : index
    %c0_41 = arith.constant 0 : index
    %61 = vector.load %arg9[%c440, %c0_41] : memref<512x8xf32, #tpu.memory_space<vmem>>, vector<64x8xf32>
    %c439 = arith.constant 439 : index
    %c0_42 = arith.constant 0 : index
    %62 = vector.load %arg9[%c439, %c0_42] : memref<512x8xf32, #tpu.memory_space<vmem>>, vector<64x8xf32>
    %63 = arith.maximumf %54, %55 : vector<64x8xf32>
    %64 = arith.maximumf %56, %57 : vector<64x8xf32>
    %65 = arith.maximumf %63, %64 : vector<64x8xf32>
    %66 = arith.select %22, %54, %58 : vector<64x8xi1>, vector<64x8xf32>
    %67 = arith.maximumf %65, %66 : vector<64x8xf32>
    %68 = arith.select %22, %54, %60 : vector<64x8xi1>, vector<64x8xf32>
    %69 = arith.maximumf %67, %68 : vector<64x8xf32>
    %70 = arith.select %27, %54, %59 : vector<64x8xi1>, vector<64x8xf32>
    %71 = arith.maximumf %69, %70 : vector<64x8xf32>
    %72 = arith.select %27, %54, %61 : vector<64x8xi1>, vector<64x8xf32>
    %73 = arith.maximumf %71, %72 : vector<64x8xf32>
    %74 = arith.select %28, %54, %62 : vector<64x8xi1>, vector<64x8xf32>
    %75 = arith.maximumf %73, %74 : vector<64x8xf32>
    %76 = arith.addf %54, %55 : vector<64x8xf32>
    %77 = arith.addf %76, %56 : vector<64x8xf32>
    %78 = arith.addf %77, %57 : vector<64x8xf32>
    %cst_43 = arith.constant 0.000000e+00 : f32
    %79 = vector.broadcast %cst_43 : f32 to vector<64x8xf32>
    %80 = arith.select %22, %79, %58 : vector<64x8xi1>, vector<64x8xf32>
    %81 = arith.addf %78, %80 : vector<64x8xf32>
    %cst_44 = arith.constant 0.000000e+00 : f32
    %82 = vector.broadcast %cst_44 : f32 to vector<64x8xf32>
    %83 = arith.select %22, %82, %60 : vector<64x8xi1>, vector<64x8xf32>
    %84 = arith.addf %81, %83 : vector<64x8xf32>
    %cst_45 = arith.constant 0.000000e+00 : f32
    %85 = vector.broadcast %cst_45 : f32 to vector<64x8xf32>
    %86 = arith.select %27, %85, %59 : vector<64x8xi1>, vector<64x8xf32>
    %87 = arith.addf %84, %86 : vector<64x8xf32>
    %cst_46 = arith.constant 0.000000e+00 : f32
    %88 = vector.broadcast %cst_46 : f32 to vector<64x8xf32>
    %89 = arith.select %27, %88, %61 : vector<64x8xi1>, vector<64x8xf32>
    %90 = arith.addf %87, %89 : vector<64x8xf32>
    %cst_47 = arith.constant 0.000000e+00 : f32
    %91 = vector.broadcast %cst_47 : f32 to vector<64x8xf32>
    %92 = arith.select %28, %91, %62 : vector<64x8xi1>, vector<64x8xf32>
    %93 = arith.addf %90, %92 : vector<64x8xf32>
    %94 = arith.mulf %93, %31 : vector<64x8xf32>
    %95 = arith.addf %53, %94 : vector<64x8xf32>
    %96 = arith.addf %95, %75 : vector<64x8xf32>
    %97 = tpu.concatenate %95, %96 in 1 : vector<64x8xf32>, vector<64x8xf32> -> vector<64x16xf32>
    %c0_48 = arith.constant 0 : index
    %c0_49 = arith.constant 0 : index
    %98 = vector.load %arg8[%c0_48, %c0_49] : memref<64x16xf32, #tpu.memory_space<vmem>>, vector<64x16xf32>
    tpu.vector_store %arg8[%c0_48, %c0_49], %97 {strides = array<i32>} : memref<64x16xf32, #tpu.memory_space<vmem>>, vector<64x16xf32>,
    return
  }
  func.func @transform_0(%arg0: i32) -> (i32, i32) {
    %c0_i32 = arith.constant 0 : i32
    %c0_i32_0 = arith.constant 0 : i32
    return %arg0, %c0_i32 : i32, i32
  }
  func.func @transform_1(%arg0: i32) -> (i32, i32) {
    %c0_i32 = arith.constant 0 : i32
    %c0_i32_0 = arith.constant 0 : i32
    return %arg0, %c0_i32 : i32, i32
  }
  func.func @transform_2(%arg0: i32) -> (i32, i32) {
    %c0_i32 = arith.constant 0 : i32
    %c0_i32_0 = arith.constant 0 : i32
    %c0_i32_1 = arith.constant 0 : i32
    return %c0_i32, %c0_i32_0 : i32, i32
  }
  func.func @transform_3(%arg0: i32) -> (i32, i32) {
    %c0_i32 = arith.constant 0 : i32
    %c0_i32_0 = arith.constant 0 : i32
    %c0_i32_1 = arith.constant 0 : i32
    return %c0_i32, %c0_i32_0 : i32, i32
  }
  func.func @transform_4(%arg0: i32) -> (i32, i32) {
    %c0_i32 = arith.constant 0 : i32
    %c0_i32_0 = arith.constant 0 : i32
    %c0_i32_1 = arith.constant 0 : i32
    return %c0_i32, %c0_i32_0 : i32, i32
  }
  func.func @transform_5(%arg0: i32) -> (i32, i32) {
    %c0_i32 = arith.constant 0 : i32
    %c0_i32_0 = arith.constant 0 : i32
    %c0_i32_1 = arith.constant 0 : i32
    return %c0_i32, %c0_i32_0 : i32, i32
  }
  func.func @transform_6(%arg0: i32) -> (i32, i32) {
    %c0_i32 = arith.constant 0 : i32
    %c0_i32_0 = arith.constant 0 : i32
    %c0_i32_1 = arith.constant 0 : i32
    return %c0_i32, %c0_i32_0 : i32, i32
  }
  func.func @transform_7(%arg0: i32) -> (i32, i32) {
    %c0_i32 = arith.constant 0 : i32
    %c0_i32_0 = arith.constant 0 : i32
    return %arg0, %c0_i32 : i32, i32
  }
}

</mosaic_0001>

<llo_original>
// kernel: _unnamed_function_.1
$region0: #{_unnamed_function_.1}
  #allocation0 [shape = 'u32[]', space=smem, size = 0x4, offset = 0x4, fixed_abs, tag = 'smem constant byte address 0x4 - core index']
  #allocation1 [shape = 'u32[144,128]{1,0:T(1,128)}', space=vmem, size = 0x12000, scoped, tag = 'internal scratch']
  #allocation2 [shape = 'f32[512,8]{1,0:T(8,128)}', space=vmem, size = 0x40000, scoped, tag = 'scratch operand']
  %s0 = inlined_call_operand.vmem [shape: f32[512,8], index: 0, kind: input, shape index: {}]
  %s1 = inlined_call_operand.vmem [shape: f32[512,8], index: 1, kind: input, shape index: {}]
  %s2 = inlined_call_operand.vmem [shape: f32[8,8], index: 2, kind: input, shape index: {}]
  %s3 = inlined_call_operand.vmem [shape: f32[1,8], index: 3, kind: input, shape index: {}]
  %s4 = inlined_call_operand.vmem [shape: f32[8,8], index: 4, kind: input, shape index: {}]
  %s5 = inlined_call_operand.vmem [shape: f32[1,8], index: 5, kind: input, shape index: {}]
  %s6 = inlined_call_operand.vmem [shape: f32[64,3], index: 6, kind: input, shape index: {}]
  %s7 = inlined_call_operand.hbm [shape: f32[128,16], index: 7, kind: output, shape index: {}]
  %s8 = sld [smem:[#allocation0]]
  $region61: #{_unnamed_function_.1} parent=0
    _
  %s10 = ssub.s32 1, %s8
  %s11 = scalar_select 0, %s10, %s8
  $region1: #{_unnamed_function_.1} parent=0
    #allocation3 [shape = 'u8[65536]{0}', space=vmem, size = 0x10000, scoped, tag = 'output window, operand 0']
    #allocation4 [shape = 's32[2]{0}', space=sflag, size = 0x8, scoped, tag = 'scoped memory for _unnamed_function_.1']
    %12 = vsyncpa [#allocation4], 0
    %s13 = scalar_lea.sflag [#allocation4], 1
    %14 = vsyncpa %s13, 0
    loop: start=0, step=1, limit=4
    $region2: #{_unnamed_function_.1} parent=1 // loop_pre_header
      _
    $region3: #{_unnamed_function_.1} parent=1 // loop_header
      %s16 = sphi 0, %s20
      %p17 = scmp.ge.s32.totalorder %s16, 4
      %s26 = sphi 0, %s28
      %s29 = sphi 0, %s26
      %s30 = sphi 0, %s29
      %s46 = sphi 0, %s30
      %s52 = sphi 0, %s54
      %s55 = sphi 0, %s52
      %s56 = sphi 0, %s55
      %s72 = sphi 0, %s56
      %s76 = sphi 0, %s76
      %s78 = sphi 0, %s76
      %s79 = sphi 0, %s78
      %s93 = sphi 0, %s79
      %s97 = sphi 0, %s97
      %s99 = sphi 0, %s97
      %s100 = sphi 0, %s99
      %s114 = sphi 0, %s100
      %s118 = sphi 0, %s118
      %s120 = sphi 0, %s118
      %s121 = sphi 0, %s120
      %s135 = sphi 0, %s121
      %s139 = sphi 0, %s139
      %s141 = sphi 0, %s139
      %s142 = sphi 0, %s141
      %s156 = sphi 0, %s142
      %s160 = sphi 0, %s160
      %s162 = sphi 0, %s160
      %s163 = sphi 0, %s162
      %s177 = sphi 0, %s163
      %s183 = sphi 0, %s185
      %s186 = sphi 0, %s183
      %s187 = sphi 0, %s186
      %s203 = sphi 0, %s187
    $region4: #{_unnamed_function_.1} parent=1 // loop_header_branch
      %19 = sbr.rel (%p17) target = $region8
    $region5: #{_unnamed_function_.1} parent=1 // loop_body
      %s21 = ssub.s32 %s16, 1
      %s22 = ssub.s32 %s16, 2
      %s23 = sadd.s32 %s16, 1
      %s24 = ssub.s32 %s16, %s23
      %p25 = scmp.eq.s32.totalorder %s24, 0
      %s27 = sadd.s32 %s26, 1
      %s28 = scalar_select %p25, %s26, %s27
      %p31 = pneg %p25
      %p32 = scmp.eq.s32.totalorder %s16, 1
      %p33 = por %p31, %p32
      %p34 = scmp.ne.s32.totalorder %s26, %s29
      %p35 = scmp.eq.s32.totalorder %s16, 0
      %p36 = por %p34, %p35
      %p37 = scmp.ne.s32.totalorder %s26, %s29
      %p38 = scmp.eq.s32.totalorder %s21, 1
      %p39 = por %p37, %p38
      %p40 = scmp.ne.s32.totalorder %s29, %s30
      %p41 = scmp.eq.s32.totalorder %s21, 0
      %p42 = por %p40, %p41
      %p43 = scmp.ne.s32.totalorder %s29, %s30
      %p44 = scmp.eq.s32.totalorder %s22, 1
      %p45 = por %p43, %p44
      %p47 = scmp.ne.s32.totalorder %s30, %s46
      %p48 = scmp.eq.s32.totalorder %s22, 0
      %p49 = por %p47, %p48
      %s50 = ssub.s32 %s16, %s23
      %p51 = scmp.eq.s32.totalorder %s50, 0
      %s53 = sadd.s32 %s52, 1
      %s54 = scalar_select %p51, %s52, %s53
      %p57 = pneg %p51
      %p58 = scmp.eq.s32.totalorder %s16, 1
      %p59 = por %p57, %p58
      %p60 = scmp.ne.s32.totalorder %s52, %s55
      %p61 = scmp.eq.s32.totalorder %s16, 0
      %p62 = por %p60, %p61
      %p63 = scmp.ne.s32.totalorder %s52, %s55
      %p64 = scmp.eq.s32.totalorder %s21, 1
      %p65 = por %p63, %p64
      %p66 = scmp.ne.s32.totalorder %s55, %s56
      %p67 = scmp.eq.s32.totalorder %s21, 0
      %p68 = por %p66, %p67
      %p69 = scmp.ne.s32.totalorder %s55, %s56
      %p70 = scmp.eq.s32.totalorder %s22, 1
      %p71 = por %p69, %p70
      %p73 = scmp.ne.s32.totalorder %s56, %s72
      %p74 = scmp.eq.s32.totalorder %s22, 0
      %p75 = por %p73, %p74
      %s77 = sadd.s32 %s76, 1
      %p80 = scmp.eq.s32.totalorder %s16, 1
      %p81 = scmp.ne.s32.totalorder %s76, %s78
      %p82 = scmp.eq.s32.totalorder %s16, 0
      %p83 = por %p81, %p82
      %p84 = scmp.ne.s32.totalorder %s76, %s78
      %p85 = scmp.eq.s32.totalorder %s21, 1
      %p86 = por %p84, %p85
      %p87 = scmp.ne.s32.totalorder %s78, %s79
      %p88 = scmp.eq.s32.totalorder %s21, 0
      %p89 = por %p87, %p88
      %p90 = scmp.ne.s32.totalorder %s78, %s79
      %p91 = scmp.eq.s32.totalorder %s22, 1
      %p92 = por %p90, %p91
      %p94 = scmp.ne.s32.totalorder %s79, %s93
      %p95 = scmp.eq.s32.totalorder %s22, 0
      %p96 = por %p94, %p95
      %s98 = sadd.s32 %s97, 1
      %p101 = scmp.eq.s32.totalorder %s16, 1
      %p102 = scmp.ne.s32.totalorder %s97, %s99
      %p103 = scmp.eq.s32.totalorder %s16, 0
      %p104 = por %p102, %p103
      %p105 = scmp.ne.s32.totalorder %s97, %s99
      %p106 = scmp.eq.s32.totalorder %s21, 1
      %p107 = por %p105, %p106
      %p108 = scmp.ne.s32.totalorder %s99, %s100
      %p109 = scmp.eq.s32.totalorder %s21, 0
      %p110 = por %p108, %p109
      %p111 = scmp.ne.s32.totalorder %s99, %s100
      %p112 = scmp.eq.s32.totalorder %s22, 1
      %p113 = por %p111, %p112
      %p115 = scmp.ne.s32.totalorder %s100, %s114
      %p116 = scmp.eq.s32.totalorder %s22, 0
      %p117 = por %p115, %p116
      %s119 = sadd.s32 %s118, 1
      %p122 = scmp.eq.s32.totalorder %s16, 1
      %p123 = scmp.ne.s32.totalorder %s118, %s120
      %p124 = scmp.eq.s32.totalorder %s16, 0
      %p125 = por %p123, %p124
      %p126 = scmp.ne.s32.totalorder %s118, %s120
      %p127 = scmp.eq.s32.totalorder %s21, 1
      %p128 = por %p126, %p127
      %p129 = scmp.ne.s32.totalorder %s120, %s121
      %p130 = scmp.eq.s32.totalorder %s21, 0
      %p131 = por %p129, %p130
      %p132 = scmp.ne.s32.totalorder %s120, %s121
      %p133 = scmp.eq.s32.totalorder %s22, 1
      %p134 = por %p132, %p133
      %p136 = scmp.ne.s32.totalorder %s121, %s135
      %p137 = scmp.eq.s32.totalorder %s22, 0
      %p138 = por %p136, %p137
      %s140 = sadd.s32 %s139, 1
      %p143 = scmp.eq.s32.totalorder %s16, 1
      %p144 = scmp.ne.s32.totalorder %s139, %s141
      %p145 = scmp.eq.s32.totalorder %s16, 0
      %p146 = por %p144, %p145
      %p147 = scmp.ne.s32.totalorder %s139, %s141
      %p148 = scmp.eq.s32.totalorder %s21, 1
      %p149 = por %p147, %p148
      %p150 = scmp.ne.s32.totalorder %s141, %s142
      %p151 = scmp.eq.s32.totalorder %s21, 0
      %p152 = por %p150, %p151
      %p153 = scmp.ne.s32.totalorder %s141, %s142
      %p154 = scmp.eq.s32.totalorder %s22, 1
      %p155 = por %p153, %p154
      %p157 = scmp.ne.s32.totalorder %s142, %s156
      %p158 = scmp.eq.s32.totalorder %s22, 0
      %p159 = por %p157, %p158
      %s161 = sadd.s32 %s160, 1
      %p164 = scmp.eq.s32.totalorder %s16, 1
      %p165 = scmp.ne.s32.totalorder %s160, %s162
      %p166 = scmp.eq.s32.totalorder %s16, 0
      %p167 = por %p165, %p166
      %p168 = scmp.ne.s32.totalorder %s160, %s162
      %p169 = scmp.eq.s32.totalorder %s21, 1
      %p170 = por %p168, %p169
      %p171 = scmp.ne.s32.totalorder %s162, %s163
      %p172 = scmp.eq.s32.totalorder %s21, 0
      %p173 = por %p171, %p172
      %p174 = scmp.ne.s32.totalorder %s162, %s163
      %p175 = scmp.eq.s32.totalorder %s22, 1
      %p176 = por %p174, %p175
      %p178 = scmp.ne.s32.totalorder %s163, %s177
      %p179 = scmp.eq.s32.totalorder %s22, 0
      %p180 = por %p178, %p179
      %s181 = ssub.s32 %s16, %s23
      %p182 = scmp.eq.s32.totalorder %s181, 0
      %s184 = sadd.s32 %s183, 1
      %s185 = scalar_select %p182, %s183, %s184
      %p188 = pneg %p182
      %p189 = scmp.eq.s32.totalorder %s16, 1
      %p190 = por %p188, %p189
      %p191 = scmp.ne.s32.totalorder %s183, %s186
      %p192 = scmp.eq.s32.totalorder %s16, 0
      %p193 = por %p191, %p192
      %p194 = scmp.ne.s32.totalorder %s183, %s186
      %p195 = scmp.eq.s32.totalorder %s21, 1
      %p196 = por %p194, %p195
      %p197 = scmp.ne.s32.totalorder %s186, %s187
      %p198 = scmp.eq.s32.totalorder %s21, 0
      %p199 = por %p197, %p198
      %p200 = scmp.ne.s32.totalorder %s186, %s187
      %p201 = scmp.eq.s32.totalorder %s22, 1
      %p202 = por %p200, %p201
      %p204 = scmp.ne.s32.totalorder %s187, %s203
      %p205 = scmp.eq.s32.totalorder %s22, 0
      %p206 = por %p204, %p205
      %p207 = scmp.le.s32.totalorder 1, %s16
      %p208 = scmp.lt.s32.totalorder %s16, 3
      %p209 = pnand %p207, %p208
      %p210 = pneg %p209
      // Predicated region
      $region9: #{_unnamed_function_.1} parent=5 // pred_check
        _
      $region10: #{_unnamed_function_.1} parent=5 // pred_check_branch
        %212 = sbr.rel (%p209) target = $region12
      $region11: #{_unnamed_function_.1} parent=5 // pred_region
        %s213 = ssub.s32 %s16, 1
        // Predicated region
        $region13: #{_unnamed_function_.1} parent=11 // pred_check
          %p214 = pneg %p89
        $region14: #{_unnamed_function_.1} parent=11 // pred_check_branch
          %216 = sbr.rel (%p214) target = $region16
        $region15: #{_unnamed_function_.1} parent=11 // pred_region
          _
        $region16: #{_unnamed_function_.1} parent=11 // pred_fallthru
          _
        // Predicated region
        $region17: #{_unnamed_function_.1} parent=11 // pred_check
          %p217 = pneg %p110
        $region18: #{_unnamed_function_.1} parent=11 // pred_check_branch
          %219 = sbr.rel (%p217) target = $region20
        $region19: #{_unnamed_function_.1} parent=11 // pred_region
          _
        $region20: #{_unnamed_function_.1} parent=11 // pred_fallthru
          _
        // Predicated region
        $region21: #{_unnamed_function_.1} parent=11 // pred_check
          %p220 = pneg %p131
        $region22: #{_unnamed_function_.1} parent=11 // pred_check_branch
          %222 = sbr.rel (%p220) target = $region24
        $region23: #{_unnamed_function_.1} parent=11 // pred_region
          _
        $region24: #{_unnamed_function_.1} parent=11 // pred_fallthru
          _
        // Predicated region
        $region25: #{_unnamed_function_.1} parent=11 // pred_check
          %p223 = pneg %p152
        $region26: #{_unnamed_function_.1} parent=11 // pred_check_branch
          %225 = sbr.rel (%p223) target = $region28
        $region27: #{_unnamed_function_.1} parent=11 // pred_region
          _
        $region28: #{_unnamed_function_.1} parent=11 // pred_fallthru
          _
        // Predicated region
        $region29: #{_unnamed_function_.1} parent=11 // pred_check
          %p226 = pneg %p173
        $region30: #{_unnamed_function_.1} parent=11 // pred_check_branch
          %228 = sbr.rel (%p226) target = $region32
        $region31: #{_unnamed_function_.1} parent=11 // pred_region
          _
        $region32: #{_unnamed_function_.1} parent=11 // pred_fallthru
          _
      $region12: #{_unnamed_function_.1} parent=5 // pred_fallthru
        _
      %p229 = scmp.lt.s32.totalorder %s16, 2
      // Predicated region
      $region33: #{_unnamed_function_.1} parent=5 // pred_check
        %p230 = pneg %p229
      $region34: #{_unnamed_function_.1} parent=5 // pred_check_branch
        %232 = sbr.rel (%p230) target = $region36
      $region35: #{_unnamed_function_.1} parent=5 // pred_region
        // Predicated region
        $region37: #{_unnamed_function_.1} parent=35 // pred_check
          %p233 = pneg %p36
        $region38: #{_unnamed_function_.1} parent=35 // pred_check_branch
          %235 = sbr.rel (%p233) target = $region40
        $region39: #{_unnamed_function_.1} parent=35 // pred_region
          %s236 = smul.u32 32, %s16
          %p237 = scmp.lt.s32.totalorder %s236, 63
          %s238 = scalar_select %p237, %s236, 63
          %s239 = smul.addr %s238, 8
          %s240 = scalar_lea.vmem %s0, %s239
          %s241 = smul.u32 32, %s16
        $region40: #{_unnamed_function_.1} parent=35 // pred_fallthru
          _
        // Predicated region
        $region41: #{_unnamed_function_.1} parent=35 // pred_check
          %p242 = pneg %p62
        $region42: #{_unnamed_function_.1} parent=35 // pred_check_branch
          %244 = sbr.rel (%p242) target = $region44
        $region43: #{_unnamed_function_.1} parent=35 // pred_region
          %s245 = smul.u32 32, %s16
          %p246 = scmp.lt.s32.totalorder %s245, 63
          %s247 = scalar_select %p246, %s245, 63
          %s248 = smul.addr %s247, 8
          %s249 = scalar_lea.vmem %s1, %s248
          %s250 = smul.u32 32, %s16
        $region44: #{_unnamed_function_.1} parent=35 // pred_fallthru
          _
      $region36: #{_unnamed_function_.1} parent=5 // pred_fallthru
        _
      %p251 = scmp.le.s32.totalorder 1, %s16
      %p252 = scmp.lt.s32.totalorder %s16, 3
      %p253 = pnand %p251, %p252
      %p254 = pneg %p253
      // Predicated region
      $region45: #{_unnamed_function_.1} parent=5 // pred_check
        _
      $region46: #{_unnamed_function_.1} parent=5 // pred_check_branch
        %256 = sbr.rel (%p253) target = $region48
      $region47: #{_unnamed_function_.1} parent=5 // pred_region
        %s257 = ssub.s32 %s16, 1
        %s258 = smul.u32 32, %s21
        %p259 = scmp.lt.s32.totalorder %s258, 63
        %s260 = scalar_select %p259, %s258, 63
        %s261 = smul.addr %s260, 8
        %s262 = scalar_lea.vmem %s0, %s261
        %p263 = pneg %p42
        %p264 = pneg %p39
        %s265 = smul.u32 32, %s21
        %p266 = scmp.lt.s32.totalorder %s265, 63
        %s267 = scalar_select %p266, %s265, 63
        %s268 = smul.addr %s267, 8
        %s269 = scalar_lea.vmem %s1, %s268
        %p270 = pneg %p68
        %p271 = pneg %p65
        %p272 = pneg %p89
        %p273 = pneg %p86
        %p274 = pneg %p110
        %p275 = pneg %p107
        %p276 = pneg %p131
        %p277 = pneg %p128
        %p278 = pneg %p152
        %p279 = pneg %p149
        %p280 = pneg %p173
        %p281 = pneg %p170
        %p282 = pneg %p199
        %p283 = pneg %p196
        %s284 = sand.u32 %s186, 1
        %s285 = scalar_lea.sflag [#allocation4], %s284
        %s286 = sand.u32 %s186, 1
        %s287 = smul.addr %s286, 64
        %s288 = scalar_lea.vmem [#allocation3], %s287
        %s289 = smul.u32 32, %s21
        %p290 = scmp.lt.s32.totalorder %s289, 63
        %s291 = scalar_select %p290, %s289, 63
        %s292 = smul.addr %s291, 8
        %s293 = scalar_lea.vmem %s0, %s292
        %s294 = smul.u32 32, %s21
        %s295 = smul.u32 32, %s21
        %p296 = scmp.lt.s32.totalorder %s295, 63
        %s297 = scalar_select %p296, %s295, 63
        %s298 = smul.addr %s297, 8
        %s299 = scalar_lea.vmem %s1, %s298
        %s300 = smul.u32 32, %s21
        %s301 = smul.u32 8, %s21
        %v302 = vld [vmem:[%s293] sm:$0xff]
        %v303 = vld [vmem:[%s293 + $0x8] sm:$0xff]
        %v304 = vld [vmem:[%s293 + $0x10] sm:$0xff]
        %v305 = vld [vmem:[%s293 + $0x18] sm:$0xff]
        %v306 = vld [vmem:[%s293 + $0x20] sm:$0xff]
        %v307 = vld [vmem:[%s293 + $0x28] sm:$0xff]
        %v308 = vld [vmem:[%s293 + $0x30] sm:$0xff]
        %v309 = vld [vmem:[%s293 + $0x38] sm:$0xff]
        %v310 = vld [vmem:[%s293 + $0x40] sm:$0xff]
        %v311 = vld [vmem:[%s293 + $0x48] sm:$0xff]
        %v312 = vld [vmem:[%s293 + $0x50] sm:$0xff]
        %v313 = vld [vmem:[%s293 + $0x58] sm:$0xff]
        %v314 = vld [vmem:[%s293 + $0x60] sm:$0xff]
        %v315 = vld [vmem:[%s293 + $0x68] sm:$0xff]
        %v316 = vld [vmem:[%s293 + $0x70] sm:$0xff]
        %v317 = vld [vmem:[%s293 + $0x78] sm:$0xff]
        %v318 = vld [vmem:[%s293 + $0x80] sm:$0xff]
        %v319 = vld [vmem:[%s293 + $0x88] sm:$0xff]
        %v320 = vld [vmem:[%s293 + $0x90] sm:$0xff]
        %v321 = vld [vmem:[%s293 + $0x98] sm:$0xff]
        %v322 = vld [vmem:[%s293 + $0xa0] sm:$0xff]
        %v323 = vld [vmem:[%s293 + $0xa8] sm:$0xff]
        %v324 = vld [vmem:[%s293 + $0xb0] sm:$0xff]
        %v325 = vld [vmem:[%s293 + $0xb8] sm:$0xff]
        %v326 = vld [vmem:[%s293 + $0xc0] sm:$0xff]
        %v327 = vld [vmem:[%s293 + $0xc8] sm:$0xff]
        %v328 = vld [vmem:[%s293 + $0xd0] sm:$0xff]
        %v329 = vld [vmem:[%s293 + $0xd8] sm:$0xff]
        %v330 = vld [vmem:[%s293 + $0xe0] sm:$0xff]
        %v331 = vld [vmem:[%s293 + $0xe8] sm:$0xff]
        %v332 = vld [vmem:[%s293 + $0xf0] sm:$0xff]
        %v333 = vld [vmem:[%s293 + $0xf8] sm:$0xff]
        %v334 = vmax.f32 %v302, 0.0
        %v335 = vmax.f32 %v303, 0.0
        %v336 = vmax.f32 %v304, 0.0
        %v337 = vmax.f32 %v305, 0.0
        %v338 = vmax.f32 %v306, 0.0
        %v339 = vmax.f32 %v307, 0.0
        %v340 = vmax.f32 %v308, 0.0
        %v341 = vmax.f32 %v309, 0.0
        %v342 = vmax.f32 %v310, 0.0
        %v343 = vmax.f32 %v311, 0.0
        %v344 = vmax.f32 %v312, 0.0
        %v345 = vmax.f32 %v313, 0.0
        %v346 = vmax.f32 %v314, 0.0
        %v347 = vmax.f32 %v315, 0.0
        %v348 = vmax.f32 %v316, 0.0
        %v349 = vmax.f32 %v317, 0.0
        %v350 = vmax.f32 %v318, 0.0
        %v351 = vmax.f32 %v319, 0.0
        %v352 = vmax.f32 %v320, 0.0
        %v353 = vmax.f32 %v321, 0.0
        %v354 = vmax.f32 %v322, 0.0
        %v355 = vmax.f32 %v323, 0.0
        %v356 = vmax.f32 %v324, 0.0
        %v357 = vmax.f32 %v325, 0.0
        %v358 = vmax.f32 %v326, 0.0
        %v359 = vmax.f32 %v327, 0.0
        %v360 = vmax.f32 %v328, 0.0
        %v361 = vmax.f32 %v329, 0.0
        %v362 = vmax.f32 %v330, 0.0
        %v363 = vmax.f32 %v331, 0.0
        %v364 = vmax.f32 %v332, 0.0
        %v365 = vmax.f32 %v333, 0.0
        %v366 = vld [vmem:[%s2] sm:$0xff]
        %v367 = vld [vmem:[%s3] sm:$0x1]
        %v369 = vlaneseq
        %v370 = vshrl.u32 %v369, 7
        %v371 = vsub.s32 0, %v370
        %v372 = vrot.slane %v367, %v371
        %vm374 = vcmask 64512
        %v376 = vsel %vm374, %v334, 0
        %v379 = vsel %vm374, %v335, 0
        %v382 = vsel %vm374, %v336, 0
        %v385 = vsel %vm374, %v337, 0
        %v388 = vsel %vm374, %v338, 0
        %v391 = vsel %vm374, %v339, 0
        %v394 = vsel %vm374, %v340, 0
        %v397 = vsel %vm374, %v341, 0
        %v400 = vsel %vm374, %v342, 0
        %v403 = vsel %vm374, %v343, 0
        %v406 = vsel %vm374, %v344, 0
        %v409 = vsel %vm374, %v345, 0
        %v412 = vsel %vm374, %v346, 0
        %v415 = vsel %vm374, %v347, 0
        %v418 = vsel %vm374, %v348, 0
        %v421 = vsel %vm374, %v349, 0
        %v424 = vsel %vm374, %v350, 0
        %v427 = vsel %vm374, %v351, 0
        %v430 = vsel %vm374, %v352, 0
        %v433 = vsel %vm374, %v353, 0
        %v436 = vsel %vm374, %v354, 0
        %v439 = vsel %vm374, %v355, 0
        %v442 = vsel %vm374, %v356, 0
        %v445 = vsel %vm374, %v357, 0
        %v448 = vsel %vm374, %v358, 0
        %v451 = vsel %vm374, %v359, 0
        %v454 = vsel %vm374, %v360, 0
        %v457 = vsel %vm374, %v361, 0
        %v460 = vsel %vm374, %v362, 0
        %v463 = vsel %vm374, %v363, 0
        %v466 = vsel %vm374, %v364, 0
        %v469 = vsel %vm374, %v365, 0
        %471 = vmatprep.subr.mxu0 0.0
        %472 = vmatpush1.msra.mxu0 0.0
        %473 = vmatprep.subr.mxu0 0.0
        %474 = vmatpush1.msra.mxu0 0.0
        %475 = vmatprep.subr.mxu0 0.0
        %476 = vmatpush1.msra.mxu0 0.0
        %477 = vmatprep.subr.mxu0 0.0
        %478 = vmatpush1.msra.mxu0 0.0
        %479 = vmatprep.subr.mxu0 0.0
        %480 = vmatpush1.msra.mxu0 0.0
        %481 = vmatprep.subr.mxu0 0.0
        %482 = vmatpush1.msra.mxu0 0.0
        %483 = vmatprep.subr.mxu0 0.0
        %484 = vmatpush1.msra.mxu0 0.0
        %485 = vmatprep.subr.mxu0 0.0
        %486 = vmatpush1.msra.mxu0 0.0
        %487 = vmatprep.subr.mxu0 0.0
        %488 = vmatpush1.msra.mxu0 0.0
        %489 = vmatprep.subr.mxu0 0.0
        %490 = vmatpush1.msra.mxu0 0.0
        %491 = vmatprep.subr.mxu0 0.0
        %492 = vmatpush1.msra.mxu0 0.0
        %493 = vmatprep.subr.mxu0 0.0
        %494 = vmatpush1.msra.mxu0 0.0
        %495 = vmatprep.subr.mxu0 0.0
        %496 = vmatpush1.msra.mxu0 0.0
        %497 = vmatprep.subr.mxu0 0.0
        %498 = vmatpush1.msra.mxu0 0.0
        %499 = vmatprep.subr.mxu0 0.0
        %500 = vmatpush1.msra.mxu0 0.0
        %501 = vmatprep.subr.mxu0 0.0
        %502 = vmatpush1.msra.mxu0 %v366
        %503 = vmatprep.subr.mxu0 0.0
        %504 = vmatpush2.msra.mxu0 0.0
        %505 = vmatprep.subr.mxu0 0.0
        %506 = vmatpush2.msra.mxu0 0.0
        %507 = vmatprep.subr.mxu0 0.0
        %508 = vmatpush2.msra.mxu0 0.0
        %509 = vmatprep.subr.mxu0 0.0
        %510 = vmatpush2.msra.mxu0 0.0
        %511 = vmatprep.subr.mxu0 0.0
        %512 = vmatpush2.msra.mxu0 0.0
        %513 = vmatprep.subr.mxu0 0.0
        %514 = vmatpush2.msra.mxu0 0.0
        %515 = vmatprep.subr.mxu0 0.0
        %516 = vmatpush2.msra.mxu0 0.0
        %517 = vmatprep.subr.mxu0 0.0
        %518 = vmatpush2.msra.mxu0 0.0
        %519 = vmatprep.subr.mxu0 0.0
        %520 = vmatpush2.msra.mxu0 0.0
        %521 = vmatprep.subr.mxu0 0.0
        %522 = vmatpush2.msra.mxu0 0.0
        %523 = vmatprep.subr.mxu0 0.0
        %524 = vmatpush2.msra.mxu0 0.0
        %525 = vmatprep.subr.mxu0 0.0
        %526 = vmatpush2.msra.mxu0 0.0
        %527 = vmatprep.subr.mxu0 0.0
        %528 = vmatpush2.msra.mxu0 0.0
        %529 = vmatprep.subr.mxu0 0.0
        %530 = vmatpush2.msra.mxu0 0.0
        %531 = vmatprep.subr.mxu0 0.0
        %532 = vmatpush2.msra.mxu0 0.0
        %533 = vmatprep.subr.mxu0 0.0
        %534 = vmatpush2.msra.mxu0 0.0
        %535 = vmatprep.mubr.f32.mxu0 0.0
        %536 = vmatmul.mubr.f32.gmra.mxu0 %v376
        %v537 = vpop.f32.mrf.mxu0
        %v538 = vadd.f32 %v372, %v537
        %v539 = vpop.f32.mrf.mxu0
        %540 = vmatprep.mubr.f32.mxu0 0.0
        %541 = vmatmul.mubr.f32.gmra.mxu0 %v379
        %v542 = vpop.f32.mrf.mxu0
        %v543 = vadd.f32 %v372, %v542
        %v544 = vpop.f32.mrf.mxu0
        %545 = vmatprep.mubr.f32.mxu0 0.0
        %546 = vmatmul.mubr.f32.gmra.mxu0 %v382
        %v547 = vpop.f32.mrf.mxu0
        %v548 = vadd.f32 %v372, %v547
        %v549 = vpop.f32.mrf.mxu0
        %550 = vmatprep.mubr.f32.mxu0 0.0
        %551 = vmatmul.mubr.f32.gmra.mxu0 %v385
        %v552 = vpop.f32.mrf.mxu0
        %v553 = vadd.f32 %v372, %v552
        %v554 = vpop.f32.mrf.mxu0
        %555 = vmatprep.mubr.f32.mxu0 0.0
        %556 = vmatmul.mubr.f32.gmra.mxu0 %v388
        %v557 = vpop.f32.mrf.mxu0
        %v558 = vadd.f32 %v372, %v557
        %v559 = vpop.f32.mrf.mxu0
        %560 = vmatprep.mubr.f32.mxu0 0.0
        %561 = vmatmul.mubr.f32.gmra.mxu0 %v391
        %v562 = vpop.f32.mrf.mxu0
        %v563 = vadd.f32 %v372, %v562
        %v564 = vpop.f32.mrf.mxu0
        %565 = vmatprep.mubr.f32.mxu0 0.0
        %566 = vmatmul.mubr.f32.gmra.mxu0 %v394
        %v567 = vpop.f32.mrf.mxu0
        %v568 = vadd.f32 %v372, %v567
        %v569 = vpop.f32.mrf.mxu0
        %570 = vmatprep.mubr.f32.mxu0 0.0
        %571 = vmatmul.mubr.f32.gmra.mxu0 %v397
        %v572 = vpop.f32.mrf.mxu0
        %v573 = vadd.f32 %v372, %v572
        %v574 = vpop.f32.mrf.mxu0
        %575 = vmatprep.mubr.f32.mxu0 0.0
        %576 = vmatmul.mubr.f32.gmra.mxu0 %v400
        %v577 = vpop.f32.mrf.mxu0
        %v578 = vadd.f32 %v372, %v577
        %v579 = vpop.f32.mrf.mxu0
        %580 = vmatprep.mubr.f32.mxu0 0.0
        %581 = vmatmul.mubr.f32.gmra.mxu0 %v403
        %v582 = vpop.f32.mrf.mxu0
        %v583 = vadd.f32 %v372, %v582
        %v584 = vpop.f32.mrf.mxu0
        %585 = vmatprep.mubr.f32.mxu0 0.0
        %586 = vmatmul.mubr.f32.gmra.mxu0 %v406
        %v587 = vpop.f32.mrf.mxu0
        %v588 = vadd.f32 %v372, %v587
        %v589 = vpop.f32.mrf.mxu0
        %590 = vmatprep.mubr.f32.mxu0 0.0
        %591 = vmatmul.mubr.f32.gmra.mxu0 %v409
        %v592 = vpop.f32.mrf.mxu0
        %v593 = vadd.f32 %v372, %v592
        %v594 = vpop.f32.mrf.mxu0
        %595 = vmatprep.mubr.f32.mxu0 0.0
        %596 = vmatmul.mubr.f32.gmra.mxu0 %v412
        %v597 = vpop.f32.mrf.mxu0
        %v598 = vadd.f32 %v372, %v597
        %v599 = vpop.f32.mrf.mxu0
        %600 = vmatprep.mubr.f32.mxu0 0.0
        %601 = vmatmul.mubr.f32.gmra.mxu0 %v415
        %v602 = vpop.f32.mrf.mxu0
        %v603 = vadd.f32 %v372, %v602
        %v604 = vpop.f32.mrf.mxu0
        %605 = vmatprep.mubr.f32.mxu0 0.0
        %606 = vmatmul.mubr.f32.gmra.mxu0 %v418
        %v607 = vpop.f32.mrf.mxu0
        %v608 = vadd.f32 %v372, %v607
        %v609 = vpop.f32.mrf.mxu0
        %610 = vmatprep.mubr.f32.mxu0 0.0
        %611 = vmatmul.mubr.f32.gmra.mxu0 %v421
        %v612 = vpop.f32.mrf.mxu0
        %v613 = vadd.f32 %v372, %v612
        %v614 = vpop.f32.mrf.mxu0
        %615 = vmatprep.mubr.f32.mxu0 0.0
        %616 = vmatmul.mubr.f32.gmra.mxu0 %v424
        %v617 = vpop.f32.mrf.mxu0
        %v618 = vadd.f32 %v372, %v617
        %v619 = vpop.f32.mrf.mxu0
        %620 = vmatprep.mubr.f32.mxu0 0.0
        %621 = vmatmul.mubr.f32.gmra.mxu0 %v427
        %v622 = vpop.f32.mrf.mxu0
        %v623 = vadd.f32 %v372, %v622
        %v624 = vpop.f32.mrf.mxu0
        %625 = vmatprep.mubr.f32.mxu0 0.0
        %626 = vmatmul.mubr.f32.gmra.mxu0 %v430
        %v627 = vpop.f32.mrf.mxu0
        %v628 = vadd.f32 %v372, %v627
        %v629 = vpop.f32.mrf.mxu0
        %630 = vmatprep.mubr.f32.mxu0 0.0
        %631 = vmatmul.mubr.f32.gmra.mxu0 %v433
        %v632 = vpop.f32.mrf.mxu0
        %v633 = vadd.f32 %v372, %v632
        %v634 = vpop.f32.mrf.mxu0
        %635 = vmatprep.mubr.f32.mxu0 0.0
        %636 = vmatmul.mubr.f32.gmra.mxu0 %v436
        %v637 = vpop.f32.mrf.mxu0
        %v638 = vadd.f32 %v372, %v637
        %v639 = vpop.f32.mrf.mxu0
        %640 = vmatprep.mubr.f32.mxu0 0.0
        %641 = vmatmul.mubr.f32.gmra.mxu0 %v439
        %v642 = vpop.f32.mrf.mxu0
        %v643 = vadd.f32 %v372, %v642
        %v644 = vpop.f32.mrf.mxu0
        %645 = vmatprep.mubr.f32.mxu0 0.0
        %646 = vmatmul.mubr.f32.gmra.mxu0 %v442
        %v647 = vpop.f32.mrf.mxu0
        %v648 = vadd.f32 %v372, %v647
        %v649 = vpop.f32.mrf.mxu0
        %650 = vmatprep.mubr.f32.mxu0 0.0
        %651 = vmatmul.mubr.f32.gmra.mxu0 %v445
        %v652 = vpop.f32.mrf.mxu0
        %v653 = vadd.f32 %v372, %v652
        %v654 = vpop.f32.mrf.mxu0
        %655 = vmatprep.mubr.f32.mxu0 0.0
        %656 = vmatmul.mubr.f32.gmra.mxu0 %v448
        %v657 = vpop.f32.mrf.mxu0
        %v658 = vadd.f32 %v372, %v657
        %v659 = vpop.f32.mrf.mxu0
        %660 = vmatprep.mubr.f32.mxu0 0.0
        %661 = vmatmul.mubr.f32.gmra.mxu0 %v451
        %v662 = vpop.f32.mrf.mxu0
        %v663 = vadd.f32 %v372, %v662
        %v664 = vpop.f32.mrf.mxu0
        %665 = vmatprep.mubr.f32.mxu0 0.0
        %666 = vmatmul.mubr.f32.gmra.mxu0 %v454
        %v667 = vpop.f32.mrf.mxu0
        %v668 = vadd.f32 %v372, %v667
        %v669 = vpop.f32.mrf.mxu0
        %670 = vmatprep.mubr.f32.mxu0 0.0
        %671 = vmatmul.mubr.f32.gmra.mxu0 %v457
        %v672 = vpop.f32.mrf.mxu0
        %v673 = vadd.f32 %v372, %v672
        %v674 = vpop.f32.mrf.mxu0
        %675 = vmatprep.mubr.f32.mxu0 0.0
        %676 = vmatmul.mubr.f32.gmra.mxu0 %v460
        %v677 = vpop.f32.mrf.mxu0
        %v678 = vadd.f32 %v372, %v677
        %v679 = vpop.f32.mrf.mxu0
        %680 = vmatprep.mubr.f32.mxu0 0.0
        %681 = vmatmul.mubr.f32.gmra.mxu0 %v463
        %v682 = vpop.f32.mrf.mxu0
        %v683 = vadd.f32 %v372, %v682
        %v684 = vpop.f32.mrf.mxu0
        %685 = vmatprep.mubr.f32.mxu0 0.0
        %686 = vmatmul.mubr.f32.gmra.mxu0 %v466
        %v687 = vpop.f32.mrf.mxu0
        %v688 = vadd.f32 %v372, %v687
        %v689 = vpop.f32.mrf.mxu0
        %690 = vmatprep.mubr.f32.mxu0 0.0
        %691 = vmatmul.mubr.f32.gmra.mxu0 %v469
        %v692 = vpop.f32.mrf.mxu0
        %v693 = vadd.f32 %v372, %v692
        %v694 = vpop.f32.mrf.mxu0
        %695 = vdwg.mxu0
        %696 = vst.msk [vmem:[#allocation2] sm:$0xff] %vm374, %v538
        %697 = vst.msk [vmem:[#allocation2 + $0x8] sm:$0xff] %vm374, %v543
        %698 = vst.msk [vmem:[#allocation2 + $0x10] sm:$0xff] %vm374, %v548
        %699 = vst.msk [vmem:[#allocation2 + $0x18] sm:$0xff] %vm374, %v553
        %700 = vst.msk [vmem:[#allocation2 + $0x20] sm:$0xff] %vm374, %v558
        %701 = vst.msk [vmem:[#allocation2 + $0x28] sm:$0xff] %vm374, %v563
        %702 = vst.msk [vmem:[#allocation2 + $0x30] sm:$0xff] %vm374, %v568
        %703 = vst.msk [vmem:[#allocation2 + $0x38] sm:$0xff] %vm374, %v573
        %704 = vst.msk [vmem:[#allocation2 + $0x40] sm:$0xff] %vm374, %v578
        %705 = vst.msk [vmem:[#allocation2 + $0x48] sm:$0xff] %vm374, %v583
        %706 = vst.msk [vmem:[#allocation2 + $0x50] sm:$0xff] %vm374, %v588
        %707 = vst.msk [vmem:[#allocation2 + $0x58] sm:$0xff] %vm374, %v593
        %708 = vst.msk [vmem:[#allocation2 + $0x60] sm:$0xff] %vm374, %v598
        %709 = vst.msk [vmem:[#allocation2 + $0x68] sm:$0xff] %vm374, %v603
        %710 = vst.msk [vmem:[#allocation2 + $0x70] sm:$0xff] %vm374, %v608
        %711 = vst.msk [vmem:[#allocation2 + $0x78] sm:$0xff] %vm374, %v613
        %712 = vst.msk [vmem:[#allocation2 + $0x80] sm:$0xff] %vm374, %v618
        %713 = vst.msk [vmem:[#allocation2 + $0x88] sm:$0xff] %vm374, %v623
        %714 = vst.msk [vmem:[#allocation2 + $0x90] sm:$0xff] %vm374, %v628
        %715 = vst.msk [vmem:[#allocation2 + $0x98] sm:$0xff] %vm374, %v633
        %716 = vst.msk [vmem:[#allocation2 + $0xa0] sm:$0xff] %vm374, %v638
        %717 = vst.msk [vmem:[#allocation2 + $0xa8] sm:$0xff] %vm374, %v643
        %718 = vst.msk [vmem:[#allocation2 + $0xb0] sm:$0xff] %vm374, %v648
        %719 = vst.msk [vmem:[#allocation2 + $0xb8] sm:$0xff] %vm374, %v653
        %720 = vst.msk [vmem:[#allocation2 + $0xc0] sm:$0xff] %vm374, %v658
        %721 = vst.msk [vmem:[#allocation2 + $0xc8] sm:$0xff] %vm374, %v663
        %722 = vst.msk [vmem:[#allocation2 + $0xd0] sm:$0xff] %vm374, %v668
        %723 = vst.msk [vmem:[#allocation2 + $0xd8] sm:$0xff] %vm374, %v673
        %724 = vst.msk [vmem:[#allocation2 + $0xe0] sm:$0xff] %vm374, %v678
        %725 = vst.msk [vmem:[#allocation2 + $0xe8] sm:$0xff] %vm374, %v683
        %726 = vst.msk [vmem:[#allocation2 + $0xf0] sm:$0xff] %vm374, %v688
        %727 = vst.msk [vmem:[#allocation2 + $0xf8] sm:$0xff] %vm374, %v693
        %v728 = vld [vmem:[%s299] sm:$0xff]
        %v729 = vld [vmem:[%s299 + $0x8] sm:$0xff]
        %v730 = vld [vmem:[%s299 + $0x10] sm:$0xff]
        %v731 = vld [vmem:[%s299 + $0x18] sm:$0xff]
        %v732 = vld [vmem:[%s299 + $0x20] sm:$0xff]
        %v733 = vld [vmem:[%s299 + $0x28] sm:$0xff]
        %v734 = vld [vmem:[%s299 + $0x30] sm:$0xff]
        %v735 = vld [vmem:[%s299 + $0x38] sm:$0xff]
        %v736 = vld [vmem:[%s299 + $0x40] sm:$0xff]
        %v737 = vld [vmem:[%s299 + $0x48] sm:$0xff]
        %v738 = vld [vmem:[%s299 + $0x50] sm:$0xff]
        %v739 = vld [vmem:[%s299 + $0x58] sm:$0xff]
        %v740 = vld [vmem:[%s299 + $0x60] sm:$0xff]
        %v741 = vld [vmem:[%s299 + $0x68] sm:$0xff]
        %v742 = vld [vmem:[%s299 + $0x70] sm:$0xff]
        %v743 = vld [vmem:[%s299 + $0x78] sm:$0xff]
        %v744 = vld [vmem:[%s299 + $0x80] sm:$0xff]
        %v745 = vld [vmem:[%s299 + $0x88] sm:$0xff]
        %v746 = vld [vmem:[%s299 + $0x90] sm:$0xff]
        %v747 = vld [vmem:[%s299 + $0x98] sm:$0xff]
        %v748 = vld [vmem:[%s299 + $0xa0] sm:$0xff]
        %v749 = vld [vmem:[%s299 + $0xa8] sm:$0xff]
        %v750 = vld [vmem:[%s299 + $0xb0] sm:$0xff]
        %v751 = vld [vmem:[%s299 + $0xb8] sm:$0xff]
        %v752 = vld [vmem:[%s299 + $0xc0] sm:$0xff]
        %v753 = vld [vmem:[%s299 + $0xc8] sm:$0xff]
        %v754 = vld [vmem:[%s299 + $0xd0] sm:$0xff]
        %v755 = vld [vmem:[%s299 + $0xd8] sm:$0xff]
        %v756 = vld [vmem:[%s299 + $0xe0] sm:$0xff]
        %v757 = vld [vmem:[%s299 + $0xe8] sm:$0xff]
        %v758 = vld [vmem:[%s299 + $0xf0] sm:$0xff]
        %v759 = vld [vmem:[%s299 + $0xf8] sm:$0xff]
        %v760 = vmax.f32 %v728, 0.0
        %v761 = vmax.f32 %v729, 0.0
        %v762 = vmax.f32 %v730, 0.0
        %v763 = vmax.f32 %v731, 0.0
        %v764 = vmax.f32 %v732, 0.0
        %v765 = vmax.f32 %v733, 0.0
        %v766 = vmax.f32 %v734, 0.0
        %v767 = vmax.f32 %v735, 0.0
        %v768 = vmax.f32 %v736, 0.0
        %v769 = vmax.f32 %v737, 0.0
        %v770 = vmax.f32 %v738, 0.0
        %v771 = vmax.f32 %v739, 0.0
        %v772 = vmax.f32 %v740, 0.0
        %v773 = vmax.f32 %v741, 0.0
        %v774 = vmax.f32 %v742, 0.0
        %v775 = vmax.f32 %v743, 0.0
        %v776 = vmax.f32 %v744, 0.0
        %v777 = vmax.f32 %v745, 0.0
        %v778 = vmax.f32 %v746, 0.0
        %v779 = vmax.f32 %v747, 0.0
        %v780 = vmax.f32 %v748, 0.0
        %v781 = vmax.f32 %v749, 0.0
        %v782 = vmax.f32 %v750, 0.0
        %v783 = vmax.f32 %v751, 0.0
        %v784 = vmax.f32 %v752, 0.0
        %v785 = vmax.f32 %v753, 0.0
        %v786 = vmax.f32 %v754, 0.0
        %v787 = vmax.f32 %v755, 0.0
        %v788 = vmax.f32 %v756, 0.0
        %v789 = vmax.f32 %v757, 0.0
        %v790 = vmax.f32 %v758, 0.0
        %v791 = vmax.f32 %v759, 0.0
        %v792 = vld [vmem:[%s4] sm:$0xff]
        %v793 = vld [vmem:[%s5] sm:$0x1]
        %v795 = vlaneseq
        %v796 = vshrl.u32 %v795, 7
        %v797 = vsub.s32 0, %v796
        %v798 = vrot.slane %v793, %v797
        %v801 = vsel %vm374, %v760, 0
        %v804 = vsel %vm374, %v761, 0
        %v807 = vsel %vm374, %v762, 0
        %v810 = vsel %vm374, %v763, 0
        %v813 = vsel %vm374, %v764, 0
        %v816 = vsel %vm374, %v765, 0
        %v819 = vsel %vm374, %v766, 0
        %v822 = vsel %vm374, %v767, 0
        %v825 = vsel %vm374, %v768, 0
        %v828 = vsel %vm374, %v769, 0
        %v831 = vsel %vm374, %v770, 0
        %v834 = vsel %vm374, %v771, 0
        %v837 = vsel %vm374, %v772, 0
        %v840 = vsel %vm374, %v773, 0
        %v843 = vsel %vm374, %v774, 0
        %v846 = vsel %vm374, %v775, 0
        %v849 = vsel %vm374, %v776, 0
        %v852 = vsel %vm374, %v777, 0
        %v855 = vsel %vm374, %v778, 0
        %v858 = vsel %vm374, %v779, 0
        %v861 = vsel %vm374, %v780, 0
        %v864 = vsel %vm374, %v781, 0
        %v867 = vsel %vm374, %v782, 0
        %v870 = vsel %vm374, %v783, 0
        %v873 = vsel %vm374, %v784, 0
        %v876 = vsel %vm374, %v785, 0
        %v879 = vsel %vm374, %v786, 0
        %v882 = vsel %vm374, %v787, 0
        %v885 = vsel %vm374, %v788, 0
        %v888 = vsel %vm374, %v789, 0
        %v891 = vsel %vm374, %v790, 0
        %v894 = vsel %vm374, %v791, 0
        %896 = vmatprep.subr.mxu0 0.0
        %897 = vmatpush1.msra.mxu0 0.0
        %898 = vmatprep.subr.mxu0 0.0
        %899 = vmatpush1.msra.mxu0 0.0
        %900 = vmatprep.subr.mxu0 0.0
        %901 = vmatpush1.msra.mxu0 0.0
        %902 = vmatprep.subr.mxu0 0.0
        %903 = vmatpush1.msra.mxu0 0.0
        %904 = vmatprep.subr.mxu0 0.0
        %905 = vmatpush1.msra.mxu0 0.0
        %906 = vmatprep.subr.mxu0 0.0
        %907 = vmatpush1.msra.mxu0 0.0
        %908 = vmatprep.subr.mxu0 0.0
        %909 = vmatpush1.msra.mxu0 0.0
        %910 = vmatprep.subr.mxu0 0.0
        %911 = vmatpush1.msra.mxu0 0.0
        %912 = vmatprep.subr.mxu0 0.0
        %913 = vmatpush1.msra.mxu0 0.0
        %914 = vmatprep.subr.mxu0 0.0
        %915 = vmatpush1.msra.mxu0 0.0
        %916 = vmatprep.subr.mxu0 0.0
        %917 = vmatpush1.msra.mxu0 0.0
        %918 = vmatprep.subr.mxu0 0.0
        %919 = vmatpush1.msra.mxu0 0.0
        %920 = vmatprep.subr.mxu0 0.0
        %921 = vmatpush1.msra.mxu0 0.0
        %922 = vmatprep.subr.mxu0 0.0
        %923 = vmatpush1.msra.mxu0 0.0
        %924 = vmatprep.subr.mxu0 0.0
        %925 = vmatpush1.msra.mxu0 0.0
        %926 = vmatprep.subr.mxu0 0.0
        %927 = vmatpush1.msra.mxu0 %v792
        %928 = vmatprep.subr.mxu0 0.0
        %929 = vmatpush2.msra.mxu0 0.0
        %930 = vmatprep.subr.mxu0 0.0
        %931 = vmatpush2.msra.mxu0 0.0
        %932 = vmatprep.subr.mxu0 0.0
        %933 = vmatpush2.msra.mxu0 0.0
        %934 = vmatprep.subr.mxu0 0.0
        %935 = vmatpush2.msra.mxu0 0.0
        %936 = vmatprep.subr.mxu0 0.0
        %937 = vmatpush2.msra.mxu0 0.0
        %938 = vmatprep.subr.mxu0 0.0
        %939 = vmatpush2.msra.mxu0 0.0
        %940 = vmatprep.subr.mxu0 0.0
        %941 = vmatpush2.msra.mxu0 0.0
        %942 = vmatprep.subr.mxu0 0.0
        %943 = vmatpush2.msra.mxu0 0.0
        %944 = vmatprep.subr.mxu0 0.0
        %945 = vmatpush2.msra.mxu0 0.0
        %946 = vmatprep.subr.mxu0 0.0
        %947 = vmatpush2.msra.mxu0 0.0
        %948 = vmatprep.subr.mxu0 0.0
        %949 = vmatpush2.msra.mxu0 0.0
        %950 = vmatprep.subr.mxu0 0.0
        %951 = vmatpush2.msra.mxu0 0.0
        %952 = vmatprep.subr.mxu0 0.0
        %953 = vmatpush2.msra.mxu0 0.0
        %954 = vmatprep.subr.mxu0 0.0
        %955 = vmatpush2.msra.mxu0 0.0
        %956 = vmatprep.subr.mxu0 0.0
        %957 = vmatpush2.msra.mxu0 0.0
        %958 = vmatprep.subr.mxu0 0.0
        %959 = vmatpush2.msra.mxu0 0.0
        %960 = vmatprep.mubr.f32.mxu0 0.0
        %961 = vmatmul.mubr.f32.gmra.mxu0 %v801
        %v962 = vpop.f32.mrf.mxu0
        %v963 = vadd.f32 %v798, %v962
        %v964 = vpop.f32.mrf.mxu0
        %965 = vmatprep.mubr.f32.mxu0 0.0
        %966 = vmatmul.mubr.f32.gmra.mxu0 %v804
        %v967 = vpop.f32.mrf.mxu0
        %v968 = vadd.f32 %v798, %v967
        %v969 = vpop.f32.mrf.mxu0
        %970 = vmatprep.mubr.f32.mxu0 0.0
        %971 = vmatmul.mubr.f32.gmra.mxu0 %v807
        %v972 = vpop.f32.mrf.mxu0
        %v973 = vadd.f32 %v798, %v972
        %v974 = vpop.f32.mrf.mxu0
        %975 = vmatprep.mubr.f32.mxu0 0.0
        %976 = vmatmul.mubr.f32.gmra.mxu0 %v810
        %v977 = vpop.f32.mrf.mxu0
        %v978 = vadd.f32 %v798, %v977
        %v979 = vpop.f32.mrf.mxu0
        %980 = vmatprep.mubr.f32.mxu0 0.0
        %981 = vmatmul.mubr.f32.gmra.mxu0 %v813
        %v982 = vpop.f32.mrf.mxu0
        %v983 = vadd.f32 %v798, %v982
        %v984 = vpop.f32.mrf.mxu0
        %985 = vmatprep.mubr.f32.mxu0 0.0
        %986 = vmatmul.mubr.f32.gmra.mxu0 %v816
        %v987 = vpop.f32.mrf.mxu0
        %v988 = vadd.f32 %v798, %v987
        %v989 = vpop.f32.mrf.mxu0
        %990 = vmatprep.mubr.f32.mxu0 0.0
        %991 = vmatmul.mubr.f32.gmra.mxu0 %v819
        %v992 = vpop.f32.mrf.mxu0
        %v993 = vadd.f32 %v798, %v992
        %v994 = vpop.f32.mrf.mxu0
        %995 = vmatprep.mubr.f32.mxu0 0.0
        %996 = vmatmul.mubr.f32.gmra.mxu0 %v822
        %v997 = vpop.f32.mrf.mxu0
        %v998 = vadd.f32 %v798, %v997
        %v999 = vpop.f32.mrf.mxu0
        %1000 = vmatprep.mubr.f32.mxu0 0.0
        %1001 = vmatmul.mubr.f32.gmra.mxu0 %v825
        %v1002 = vpop.f32.mrf.mxu0
        %v1003 = vadd.f32 %v798, %v1002
        %v1004 = vpop.f32.mrf.mxu0
        %1005 = vmatprep.mubr.f32.mxu0 0.0
        %1006 = vmatmul.mubr.f32.gmra.mxu0 %v828
        %v1007 = vpop.f32.mrf.mxu0
        %v1008 = vadd.f32 %v798, %v1007
        %v1009 = vpop.f32.mrf.mxu0
        %1010 = vmatprep.mubr.f32.mxu0 0.0
        %1011 = vmatmul.mubr.f32.gmra.mxu0 %v831
        %v1012 = vpop.f32.mrf.mxu0
        %v1013 = vadd.f32 %v798, %v1012
        %v1014 = vpop.f32.mrf.mxu0
        %1015 = vmatprep.mubr.f32.mxu0 0.0
        %1016 = vmatmul.mubr.f32.gmra.mxu0 %v834
        %v1017 = vpop.f32.mrf.mxu0
        %v1018 = vadd.f32 %v798, %v1017
        %v1019 = vpop.f32.mrf.mxu0
        %1020 = vmatprep.mubr.f32.mxu0 0.0
        %1021 = vmatmul.mubr.f32.gmra.mxu0 %v837
        %v1022 = vpop.f32.mrf.mxu0
        %v1023 = vadd.f32 %v798, %v1022
        %v1024 = vpop.f32.mrf.mxu0
        %1025 = vmatprep.mubr.f32.mxu0 0.0
        %1026 = vmatmul.mubr.f32.gmra.mxu0 %v840
        %v1027 = vpop.f32.mrf.mxu0
        %v1028 = vadd.f32 %v798, %v1027
        %v1029 = vpop.f32.mrf.mxu0
        %1030 = vmatprep.mubr.f32.mxu0 0.0
        %1031 = vmatmul.mubr.f32.gmra.mxu0 %v843
        %v1032 = vpop.f32.mrf.mxu0
        %v1033 = vadd.f32 %v798, %v1032
        %v1034 = vpop.f32.mrf.mxu0
        %1035 = vmatprep.mubr.f32.mxu0 0.0
        %1036 = vmatmul.mubr.f32.gmra.mxu0 %v846
        %v1037 = vpop.f32.mrf.mxu0
        %v1038 = vadd.f32 %v798, %v1037
        %v1039 = vpop.f32.mrf.mxu0
        %1040 = vmatprep.mubr.f32.mxu0 0.0
        %1041 = vmatmul.mubr.f32.gmra.mxu0 %v849
        %v1042 = vpop.f32.mrf.mxu0
        %v1043 = vadd.f32 %v798, %v1042
        %v1044 = vpop.f32.mrf.mxu0
        %1045 = vmatprep.mubr.f32.mxu0 0.0
        %1046 = vmatmul.mubr.f32.gmra.mxu0 %v852
        %v1047 = vpop.f32.mrf.mxu0
        %v1048 = vadd.f32 %v798, %v1047
        %v1049 = vpop.f32.mrf.mxu0
        %1050 = vmatprep.mubr.f32.mxu0 0.0
        %1051 = vmatmul.mubr.f32.gmra.mxu0 %v855
        %v1052 = vpop.f32.mrf.mxu0
        %v1053 = vadd.f32 %v798, %v1052
        %v1054 = vpop.f32.mrf.mxu0
        %1055 = vmatprep.mubr.f32.mxu0 0.0
        %1056 = vmatmul.mubr.f32.gmra.mxu0 %v858
        %v1057 = vpop.f32.mrf.mxu0
        %v1058 = vadd.f32 %v798, %v1057
        %v1059 = vpop.f32.mrf.mxu0
        %1060 = vmatprep.mubr.f32.mxu0 0.0
        %1061 = vmatmul.mubr.f32.gmra.mxu0 %v861
        %v1062 = vpop.f32.mrf.mxu0
        %v1063 = vadd.f32 %v798, %v1062
        %v1064 = vpop.f32.mrf.mxu0
        %1065 = vmatprep.mubr.f32.mxu0 0.0
        %1066 = vmatmul.mubr.f32.gmra.mxu0 %v864
        %v1067 = vpop.f32.mrf.mxu0
        %v1068 = vadd.f32 %v798, %v1067
        %v1069 = vpop.f32.mrf.mxu0
        %1070 = vmatprep.mubr.f32.mxu0 0.0
        %1071 = vmatmul.mubr.f32.gmra.mxu0 %v867
        %v1072 = vpop.f32.mrf.mxu0
        %v1073 = vadd.f32 %v798, %v1072
        %v1074 = vpop.f32.mrf.mxu0
        %1075 = vmatprep.mubr.f32.mxu0 0.0
        %1076 = vmatmul.mubr.f32.gmra.mxu0 %v870
        %v1077 = vpop.f32.mrf.mxu0
        %v1078 = vadd.f32 %v798, %v1077
        %v1079 = vpop.f32.mrf.mxu0
        %1080 = vmatprep.mubr.f32.mxu0 0.0
        %1081 = vmatmul.mubr.f32.gmra.mxu0 %v873
        %v1082 = vpop.f32.mrf.mxu0
        %v1083 = vadd.f32 %v798, %v1082
        %v1084 = vpop.f32.mrf.mxu0
        %1085 = vmatprep.mubr.f32.mxu0 0.0
        %1086 = vmatmul.mubr.f32.gmra.mxu0 %v876
        %v1087 = vpop.f32.mrf.mxu0
        %v1088 = vadd.f32 %v798, %v1087
        %v1089 = vpop.f32.mrf.mxu0
        %1090 = vmatprep.mubr.f32.mxu0 0.0
        %1091 = vmatmul.mubr.f32.gmra.mxu0 %v879
        %v1092 = vpop.f32.mrf.mxu0
        %v1093 = vadd.f32 %v798, %v1092
        %v1094 = vpop.f32.mrf.mxu0
        %1095 = vmatprep.mubr.f32.mxu0 0.0
        %1096 = vmatmul.mubr.f32.gmra.mxu0 %v882
        %v1097 = vpop.f32.mrf.mxu0
        %v1098 = vadd.f32 %v798, %v1097
        %v1099 = vpop.f32.mrf.mxu0
        %1100 = vmatprep.mubr.f32.mxu0 0.0
        %1101 = vmatmul.mubr.f32.gmra.mxu0 %v885
        %v1102 = vpop.f32.mrf.mxu0
        %v1103 = vadd.f32 %v798, %v1102
        %v1104 = vpop.f32.mrf.mxu0
        %1105 = vmatprep.mubr.f32.mxu0 0.0
        %1106 = vmatmul.mubr.f32.gmra.mxu0 %v888
        %v1107 = vpop.f32.mrf.mxu0
        %v1108 = vadd.f32 %v798, %v1107
        %v1109 = vpop.f32.mrf.mxu0
        %1110 = vmatprep.mubr.f32.mxu0 0.0
        %1111 = vmatmul.mubr.f32.gmra.mxu0 %v891
        %v1112 = vpop.f32.mrf.mxu0
        %v1113 = vadd.f32 %v798, %v1112
        %v1114 = vpop.f32.mrf.mxu0
        %1115 = vmatprep.mubr.f32.mxu0 0.0
        %1116 = vmatmul.mubr.f32.gmra.mxu0 %v894
        %v1117 = vpop.f32.mrf.mxu0
        %v1118 = vadd.f32 %v798, %v1117
        %v1119 = vpop.f32.mrf.mxu0
        %1120 = vdwg.mxu0
        %1121 = vst.msk [vmem:[#allocation2 + $0x100] sm:$0xff] %vm374, %v963
        %1122 = vst.msk [vmem:[#allocation2 + $0x108] sm:$0xff] %vm374, %v968
        %1123 = vst.msk [vmem:[#allocation2 + $0x110] sm:$0xff] %vm374, %v973
        %1124 = vst.msk [vmem:[#allocation2 + $0x118] sm:$0xff] %vm374, %v978
        %1125 = vst.msk [vmem:[#allocation2 + $0x120] sm:$0xff] %vm374, %v983
        %1126 = vst.msk [vmem:[#allocation2 + $0x128] sm:$0xff] %vm374, %v988
        %1127 = vst.msk [vmem:[#allocation2 + $0x130] sm:$0xff] %vm374, %v993
        %1128 = vst.msk [vmem:[#allocation2 + $0x138] sm:$0xff] %vm374, %v998
        %1129 = vst.msk [vmem:[#allocation2 + $0x140] sm:$0xff] %vm374, %v1003
        %1130 = vst.msk [vmem:[#allocation2 + $0x148] sm:$0xff] %vm374, %v1008
        %1131 = vst.msk [vmem:[#allocation2 + $0x150] sm:$0xff] %vm374, %v1013
        %1132 = vst.msk [vmem:[#allocation2 + $0x158] sm:$0xff] %vm374, %v1018
        %1133 = vst.msk [vmem:[#allocation2 + $0x160] sm:$0xff] %vm374, %v1023
        %1134 = vst.msk [vmem:[#allocation2 + $0x168] sm:$0xff] %vm374, %v1028
        %1135 = vst.msk [vmem:[#allocation2 + $0x170] sm:$0xff] %vm374, %v1033
        %1136 = vst.msk [vmem:[#allocation2 + $0x178] sm:$0xff] %vm374, %v1038
        %1137 = vst.msk [vmem:[#allocation2 + $0x180] sm:$0xff] %vm374, %v1043
        %1138 = vst.msk [vmem:[#allocation2 + $0x188] sm:$0xff] %vm374, %v1048
        %1139 = vst.msk [vmem:[#allocation2 + $0x190] sm:$0xff] %vm374, %v1053
        %1140 = vst.msk [vmem:[#allocation2 + $0x198] sm:$0xff] %vm374, %v1058
        %1141 = vst.msk [vmem:[#allocation2 + $0x1a0] sm:$0xff] %vm374, %v1063
        %1142 = vst.msk [vmem:[#allocation2 + $0x1a8] sm:$0xff] %vm374, %v1068
        %1143 = vst.msk [vmem:[#allocation2 + $0x1b0] sm:$0xff] %vm374, %v1073
        %1144 = vst.msk [vmem:[#allocation2 + $0x1b8] sm:$0xff] %vm374, %v1078
        %1145 = vst.msk [vmem:[#allocation2 + $0x1c0] sm:$0xff] %vm374, %v1083
        %1146 = vst.msk [vmem:[#allocation2 + $0x1c8] sm:$0xff] %vm374, %v1088
        %1147 = vst.msk [vmem:[#allocation2 + $0x1d0] sm:$0xff] %vm374, %v1093
        %1148 = vst.msk [vmem:[#allocation2 + $0x1d8] sm:$0xff] %vm374, %v1098
        %1149 = vst.msk [vmem:[#allocation2 + $0x1e0] sm:$0xff] %vm374, %v1103
        %1150 = vst.msk [vmem:[#allocation2 + $0x1e8] sm:$0xff] %vm374, %v1108
        %1151 = vst.msk [vmem:[#allocation2 + $0x1f0] sm:$0xff] %vm374, %v1113
        %1152 = vst.msk [vmem:[#allocation2 + $0x1f8] sm:$0xff] %vm374, %v1118
        %v1153 = vld [vmem:[%s6] sm:$0xff]
        %v1154 = vld [vmem:[%s6 + $0x8] sm:$0xff]
        %v1155 = vld [vmem:[%s6 + $0x10] sm:$0xff]
        %v1156 = vld [vmem:[%s6 + $0x18] sm:$0xff]
        %v1157 = vld [vmem:[%s6 + $0x20] sm:$0xff]
        %v1158 = vld [vmem:[%s6 + $0x28] sm:$0xff]
        %v1159 = vld [vmem:[%s6 + $0x30] sm:$0xff]
        %v1160 = vld [vmem:[%s6 + $0x38] sm:$0xff]
        %1162 = vset.pattern.permute.xlu0 0
        %1163 = vperm.xlu0 %1162, %v1153
        %v1164 = vpop.permute.xlu0 %1163
        %1167 = vset.pattern.permute.xlu0 0
        %1168 = vperm.xlu0 %1167, %v1154
        %v1169 = vpop.permute.xlu0 %1168
        %1172 = vset.pattern.permute.xlu0 0
        %1173 = vperm.xlu0 %1172, %v1155
        %v1174 = vpop.permute.xlu0 %1173
        %1177 = vset.pattern.permute.xlu0 0
        %1178 = vperm.xlu0 %1177, %v1156
        %v1179 = vpop.permute.xlu0 %1178
        %1182 = vset.pattern.permute.xlu0 0
        %1183 = vperm.xlu0 %1182, %v1157
        %v1184 = vpop.permute.xlu0 %1183
        %1187 = vset.pattern.permute.xlu0 0
        %1188 = vperm.xlu0 %1187, %v1158
        %v1189 = vpop.permute.xlu0 %1188
        %1192 = vset.pattern.permute.xlu0 0
        %1193 = vperm.xlu0 %1192, %v1159
        %v1194 = vpop.permute.xlu0 %1193
        %1197 = vset.pattern.permute.xlu0 0
        %1198 = vperm.xlu0 %1197, %v1160
        %v1199 = vpop.permute.xlu0 %1198
        %vm1201 = vcmp.gt.f32.partialorder %v1164, 0.5
        %vm1202 = vcmp.gt.f32.partialorder %v1169, 0.5
        %vm1203 = vcmp.gt.f32.partialorder %v1174, 0.5
        %vm1204 = vcmp.gt.f32.partialorder %v1179, 0.5
        %vm1205 = vcmp.gt.f32.partialorder %v1184, 0.5
        %vm1206 = vcmp.gt.f32.partialorder %v1189, 0.5
        %vm1207 = vcmp.gt.f32.partialorder %v1194, 0.5
        %vm1208 = vcmp.gt.f32.partialorder %v1199, 0.5
        %1209 = vset.pattern.permute.xlu0 1
        %1210 = vperm.xlu0 %1209, %v1153
        %v1211 = vpop.permute.xlu0 %1210
        %1213 = vset.pattern.permute.xlu0 1
        %1214 = vperm.xlu0 %1213, %v1154
        %v1215 = vpop.permute.xlu0 %1214
        %1217 = vset.pattern.permute.xlu0 1
        %1218 = vperm.xlu0 %1217, %v1155
        %v1219 = vpop.permute.xlu0 %1218
        %1221 = vset.pattern.permute.xlu0 1
        %1222 = vperm.xlu0 %1221, %v1156
        %v1223 = vpop.permute.xlu0 %1222
        %1225 = vset.pattern.permute.xlu0 1
        %1226 = vperm.xlu0 %1225, %v1157
        %v1227 = vpop.permute.xlu0 %1226
        %1229 = vset.pattern.permute.xlu0 1
        %1230 = vperm.xlu0 %1229, %v1158
        %v1231 = vpop.permute.xlu0 %1230
        %1233 = vset.pattern.permute.xlu0 1
        %1234 = vperm.xlu0 %1233, %v1159
        %v1235 = vpop.permute.xlu0 %1234
        %1237 = vset.pattern.permute.xlu0 1
        %1238 = vperm.xlu0 %1237, %v1160
        %v1239 = vpop.permute.xlu0 %1238
        %vm1241 = vcmp.gt.f32.partialorder %v1211, 0.5
        %vm1242 = vcmp.gt.f32.partialorder %v1215, 0.5
        %vm1243 = vcmp.gt.f32.partialorder %v1219, 0.5
        %vm1244 = vcmp.gt.f32.partialorder %v1223, 0.5
        %vm1245 = vcmp.gt.f32.partialorder %v1227, 0.5
        %vm1246 = vcmp.gt.f32.partialorder %v1231, 0.5
        %vm1247 = vcmp.gt.f32.partialorder %v1235, 0.5
        %vm1248 = vcmp.gt.f32.partialorder %v1239, 0.5
        %vm1249 = vmor %vm1201, %vm1241
        %vm1250 = vmor %vm1202, %vm1242
        %vm1251 = vmor %vm1203, %vm1243
        %vm1252 = vmor %vm1204, %vm1244
        %vm1253 = vmor %vm1205, %vm1245
        %vm1254 = vmor %vm1206, %vm1246
        %vm1255 = vmor %vm1207, %vm1247
        %vm1256 = vmor %vm1208, %vm1248
        %1257 = vset.pattern.permute.xlu0 2
        %1258 = vperm.xlu0 %1257, %v1153
        %v1259 = vpop.permute.xlu0 %1258
        %1261 = vset.pattern.permute.xlu0 2
        %1262 = vperm.xlu0 %1261, %v1154
        %v1263 = vpop.permute.xlu0 %1262
        %1265 = vset.pattern.permute.xlu0 2
        %1266 = vperm.xlu0 %1265, %v1155
        %v1267 = vpop.permute.xlu0 %1266
        %1269 = vset.pattern.permute.xlu0 2
        %1270 = vperm.xlu0 %1269, %v1156
        %v1271 = vpop.permute.xlu0 %1270
        %1273 = vset.pattern.permute.xlu0 2
        %1274 = vperm.xlu0 %1273, %v1157
        %v1275 = vpop.permute.xlu0 %1274
        %1277 = vset.pattern.permute.xlu0 2
        %1278 = vperm.xlu0 %1277, %v1158
        %v1279 = vpop.permute.xlu0 %1278
        %1281 = vset.pattern.permute.xlu0 2
        %1282 = vperm.xlu0 %1281, %v1159
        %v1283 = vpop.permute.xlu0 %1282
        %1285 = vset.pattern.permute.xlu0 2
        %1286 = vperm.xlu0 %1285, %v1160
        %v1287 = vpop.permute.xlu0 %1286
        %v1289 = vld [vmem:[#allocation2] sm:$0xff]
        %v1290 = vld [vmem:[#allocation2 + $0x8] sm:$0xff]
        %v1291 = vld [vmem:[#allocation2 + $0x10] sm:$0xff]
        %v1292 = vld [vmem:[#allocation2 + $0x18] sm:$0xff]
        %v1293 = vld [vmem:[#allocation2 + $0x20] sm:$0xff]
        %v1294 = vld [vmem:[#allocation2 + $0x28] sm:$0xff]
        %v1295 = vld [vmem:[#allocation2 + $0x30] sm:$0xff]
        %v1296 = vld [vmem:[#allocation2 + $0x38] sm:$0xff]
        %v1297 = vld [vmem:[#allocation2 + $0x40] sm:$0xff]
        %v1298 = vld [vmem:[#allocation2 + $0x48] sm:$0xff]
        %v1299 = vld [vmem:[#allocation2 + $0x50] sm:$0xff]
        %v1300 = vld [vmem:[#allocation2 + $0x58] sm:$0xff]
        %v1301 = vld [vmem:[#allocation2 + $0x60] sm:$0xff]
        %v1302 = vld [vmem:[#allocation2 + $0x68] sm:$0xff]
        %v1303 = vld [vmem:[#allocation2 + $0x70] sm:$0xff]
        %v1304 = vld [vmem:[#allocation2 + $0x78] sm:$0xff]
        %v1305 = vld [vmem:[#allocation2 + $0x80] sm:$0xff]
        %v1306 = vld [vmem:[#allocation2 + $0x88] sm:$0xff]
        %v1307 = vld [vmem:[#allocation2 + $0x90] sm:$0xff]
        %v1308 = vld [vmem:[#allocation2 + $0x98] sm:$0xff]
        %v1309 = vld [vmem:[#allocation2 + $0xa0] sm:$0xff]
        %v1310 = vld [vmem:[#allocation2 + $0xa8] sm:$0xff]
        %v1311 = vld [vmem:[#allocation2 + $0xb0] sm:$0xff]
        %v1312 = vld [vmem:[#allocation2 + $0xb8] sm:$0xff]
        %v1313 = vld [vmem:[#allocation2 + $0xc0] sm:$0xff]
        %v1314 = vld [vmem:[#allocation2 + $0xc8] sm:$0xff]
        %v1315 = vld [vmem:[#allocation2 + $0xd0] sm:$0xff]
        %v1316 = vld [vmem:[#allocation2 + $0xd8] sm:$0xff]
        %v1317 = vld [vmem:[#allocation2 + $0xe0] sm:$0xff]
        %v1318 = vld [vmem:[#allocation2 + $0xe8] sm:$0xff]
        %v1319 = vld [vmem:[#allocation2 + $0xf0] sm:$0xff]
        %v1320 = vld [vmem:[#allocation2 + $0xf8] sm:$0xff]
        %v1321 = vld [vmem:[#allocation2 + $0x3f] sm:$0xff]
        %v1322 = vld [vmem:[#allocation2 + $0x47] sm:$0xff]
        %v1323 = vld [vmem:[#allocation2 + $0x4f] sm:$0xff]
        %v1324 = vld [vmem:[#allocation2 + $0x57] sm:$0xff]
        %v1325 = vld [vmem:[#allocation2 + $0x5f] sm:$0xff]
        %v1326 = vld [vmem:[#allocation2 + $0x67] sm:$0xff]
        %v1327 = vld [vmem:[#allocation2 + $0x6f] sm:$0xff]
        %v1328 = vld [vmem:[#allocation2 + $0x77] sm:$0xff]
        %v1329 = vld [vmem:[#allocation2 + $0xbf] sm:$0xff]
        %v1330 = vld [vmem:[#allocation2 + $0xc7] sm:$0xff]
        %v1331 = vld [vmem:[#allocation2 + $0xcf] sm:$0xff]
        %v1332 = vld [vmem:[#allocation2 + $0xd7] sm:$0xff]
        %v1333 = vld [vmem:[#allocation2 + $0xdf] sm:$0xff]
        %v1334 = vld [vmem:[#allocation2 + $0xe7] sm:$0xff]
        %v1335 = vld [vmem:[#allocation2 + $0xef] sm:$0xff]
        %v1336 = vld [vmem:[#allocation2 + $0xf7] sm:$0xff]
        %v1337 = vld [vmem:[#allocation2 + $0xb7] sm:$0xff]
        %v1338 = vmax.f32 %v1289, %v1297
        %v1339 = vmax.f32 %v1290, %v1298
        %v1340 = vmax.f32 %v1291, %v1299
        %v1341 = vmax.f32 %v1292, %v1300
        %v1342 = vmax.f32 %v1293, %v1301
        %v1343 = vmax.f32 %v1294, %v1302
        %v1344 = vmax.f32 %v1295, %v1303
        %v1345 = vmax.f32 %v1296, %v1304
        %v1346 = vmax.f32 %v1305, %v1313
        %v1347 = vmax.f32 %v1306, %v1314
        %v1348 = vmax.f32 %v1307, %v1315
        %v1349 = vmax.f32 %v1308, %v1316
        %v1350 = vmax.f32 %v1309, %v1317
        %v1351 = vmax.f32 %v1310, %v1318
        %v1352 = vmax.f32 %v1311, %v1319
        %v1353 = vmax.f32 %v1312, %v1320
        %v1354 = vmax.f32 %v1338, %v1346
        %v1355 = vmax.f32 %v1339, %v1347
        %v1356 = vmax.f32 %v1340, %v1348
        %v1357 = vmax.f32 %v1341, %v1349
        %v1358 = vmax.f32 %v1342, %v1350
        %v1359 = vmax.f32 %v1343, %v1351
        %v1360 = vmax.f32 %v1344, %v1352
        %v1361 = vmax.f32 %v1345, %v1353
        %v1362 = vsel %vm1201, %v1289, %v1321
        %v1363 = vsel %vm1202, %v1290, %v1322
        %v1364 = vsel %vm1203, %v1291, %v1323
        %v1365 = vsel %vm1204, %v1292, %v1324
        %v1366 = vsel %vm1205, %v1293, %v1325
        %v1367 = vsel %vm1206, %v1294, %v1326
        %v1368 = vsel %vm1207, %v1295, %v1327
        %v1369 = vsel %vm1208, %v1296, %v1328
        %v1370 = vmax.f32 %v1354, %v1362
        %v1371 = vmax.f32 %v1355, %v1363
        %v1372 = vmax.f32 %v1356, %v1364
        %v1373 = vmax.f32 %v1357, %v1365
        %v1374 = vmax.f32 %v1358, %v1366
        %v1375 = vmax.f32 %v1359, %v1367
        %v1376 = vmax.f32 %v1360, %v1368
        %v1377 = vmax.f32 %v1361, %v1369
        %v1378 = vsel %vm1201, %v1289, %v1329
        %v1379 = vsel %vm1202, %v1290, %v1330
        %v1380 = vsel %vm1203, %v1291, %v1331
        %v1381 = vsel %vm1204, %v1292, %v1332
        %v1382 = vsel %vm1205, %v1293, %v1333
        %v1383 = vsel %vm1206, %v1294, %v1334
        %v1384 = vsel %vm1207, %v1295, %v1335
        %v1385 = vsel %vm1208, %v1296, %v1336
        %v1386 = vmax.f32 %v1370, %v1378
        %v1387 = vmax.f32 %v1371, %v1379
        %v1388 = vmax.f32 %v1372, %v1380
        %v1389 = vmax.f32 %v1373, %v1381
        %v1390 = vmax.f32 %v1374, %v1382
        %v1391 = vmax.f32 %v1375, %v1383
        %v1392 = vmax.f32 %v1376, %v1384
        %v1393 = vmax.f32 %v1377, %v1385
        %v1394 = vsel %vm1241, %v1289, %v1304
        %v1395 = vsel %vm1242, %v1290, %v1305
        %v1396 = vsel %vm1243, %v1291, %v1306
        %v1397 = vsel %vm1244, %v1292, %v1307
        %v1398 = vsel %vm1245, %v1293, %v1308
        %v1399 = vsel %vm1246, %v1294, %v1309
        %v1400 = vsel %vm1247, %v1295, %v1310
        %v1401 = vsel %vm1248, %v1296, %v1311
        %v1402 = vmax.f32 %v1386, %v1394
        %v1403 = vmax.f32 %v1387, %v1395
        %v1404 = vmax.f32 %v1388, %v1396
        %v1405 = vmax.f32 %v1389, %v1397
        %v1406 = vmax.f32 %v1390, %v1398
        %v1407 = vmax.f32 %v1391, %v1399
        %v1408 = vmax.f32 %v1392, %v1400
        %v1409 = vmax.f32 %v1393, %v1401
        %v1410 = vsel %vm1241, %v1289, %v1312
        %v1411 = vsel %vm1242, %v1290, %v1313
        %v1412 = vsel %vm1243, %v1291, %v1314
        %v1413 = vsel %vm1244, %v1292, %v1315
        %v1414 = vsel %vm1245, %v1293, %v1316
        %v1415 = vsel %vm1246, %v1294, %v1317
        %v1416 = vsel %vm1247, %v1295, %v1318
        %v1417 = vsel %vm1248, %v1296, %v1319
        %v1418 = vmax.f32 %v1402, %v1410
        %v1419 = vmax.f32 %v1403, %v1411
        %v1420 = vmax.f32 %v1404, %v1412
        %v1421 = vmax.f32 %v1405, %v1413
        %v1422 = vmax.f32 %v1406, %v1414
        %v1423 = vmax.f32 %v1407, %v1415
        %v1424 = vmax.f32 %v1408, %v1416
        %v1425 = vmax.f32 %v1409, %v1417
        %v1426 = vsel %vm1249, %v1289, %v1337
        %v1427 = vsel %vm1250, %v1290, %v1329
        %v1428 = vsel %vm1251, %v1291, %v1330
        %v1429 = vsel %vm1252, %v1292, %v1331
        %v1430 = vsel %vm1253, %v1293, %v1332
        %v1431 = vsel %vm1254, %v1294, %v1333
        %v1432 = vsel %vm1255, %v1295, %v1334
        %v1433 = vsel %vm1256, %v1296, %v1335
        %v1434 = vmax.f32 %v1418, %v1426
        %v1435 = vmax.f32 %v1419, %v1427
        %v1436 = vmax.f32 %v1420, %v1428
        %v1437 = vmax.f32 %v1421, %v1429
        %v1438 = vmax.f32 %v1422, %v1430
        %v1439 = vmax.f32 %v1423, %v1431
        %v1440 = vmax.f32 %v1424, %v1432
        %v1441 = vmax.f32 %v1425, %v1433
        %v1442 = vld [vmem:[#allocation2 + $0x100] sm:$0xff]
        %v1443 = vld [vmem:[#allocation2 + $0x108] sm:$0xff]
        %v1444 = vld [vmem:[#allocation2 + $0x110] sm:$0xff]
        %v1445 = vld [vmem:[#allocation2 + $0x118] sm:$0xff]
        %v1446 = vld [vmem:[#allocation2 + $0x120] sm:$0xff]
        %v1447 = vld [vmem:[#allocation2 + $0x128] sm:$0xff]
        %v1448 = vld [vmem:[#allocation2 + $0x130] sm:$0xff]
        %v1449 = vld [vmem:[#allocation2 + $0x138] sm:$0xff]
        %v1450 = vld [vmem:[#allocation2 + $0x140] sm:$0xff]
        %v1451 = vld [vmem:[#allocation2 + $0x148] sm:$0xff]
        %v1452 = vld [vmem:[#allocation2 + $0x150] sm:$0xff]
        %v1453 = vld [vmem:[#allocation2 + $0x158] sm:$0xff]
        %v1454 = vld [vmem:[#allocation2 + $0x160] sm:$0xff]
        %v1455 = vld [vmem:[#allocation2 + $0x168] sm:$0xff]
        %v1456 = vld [vmem:[#allocation2 + $0x170] sm:$0xff]
        %v1457 = vld [vmem:[#allocation2 + $0x178] sm:$0xff]
        %v1458 = vld [vmem:[#allocation2 + $0x180] sm:$0xff]
        %v1459 = vld [vmem:[#allocation2 + $0x188] sm:$0xff]
        %v1460 = vld [vmem:[#allocation2 + $0x190] sm:$0xff]
        %v1461 = vld [vmem:[#allocation2 + $0x198] sm:$0xff]
        %v1462 = vld [vmem:[#allocation2 + $0x1a0] sm:$0xff]
        %v1463 = vld [vmem:[#allocation2 + $0x1a8] sm:$0xff]
        %v1464 = vld [vmem:[#allocation2 + $0x1b0] sm:$0xff]
        %v1465 = vld [vmem:[#allocation2 + $0x1b8] sm:$0xff]
        %v1466 = vld [vmem:[#allocation2 + $0x1c0] sm:$0xff]
        %v1467 = vld [vmem:[#allocation2 + $0x1c8] sm:$0xff]
        %v1468 = vld [vmem:[#allocation2 + $0x1d0] sm:$0xff]
        %v1469 = vld [vmem:[#allocation2 + $0x1d8] sm:$0xff]
        %v1470 = vld [vmem:[#allocation2 + $0x1e0] sm:$0xff]
        %v1471 = vld [vmem:[#allocation2 + $0x1e8] sm:$0xff]
        %v1472 = vld [vmem:[#allocation2 + $0x1f0] sm:$0xff]
        %v1473 = vld [vmem:[#allocation2 + $0x1f8] sm:$0xff]
        %v1474 = vld [vmem:[#allocation2 + $0x13f] sm:$0xff]
        %v1475 = vld [vmem:[#allocation2 + $0x147] sm:$0xff]
        %v1476 = vld [vmem:[#allocation2 + $0x14f] sm:$0xff]
        %v1477 = vld [vmem:[#allocation2 + $0x157] sm:$0xff]
        %v1478 = vld [vmem:[#allocation2 + $0x15f] sm:$0xff]
        %v1479 = vld [vmem:[#allocation2 + $0x167] sm:$0xff]
        %v1480 = vld [vmem:[#allocation2 + $0x16f] sm:$0xff]
        %v1481 = vld [vmem:[#allocation2 + $0x177] sm:$0xff]
        %v1482 = vld [vmem:[#allocation2 + $0x1bf] sm:$0xff]
        %v1483 = vld [vmem:[#allocation2 + $0x1c7] sm:$0xff]
        %v1484 = vld [vmem:[#allocation2 + $0x1cf] sm:$0xff]
        %v1485 = vld [vmem:[#allocation2 + $0x1d7] sm:$0xff]
        %v1486 = vld [vmem:[#allocation2 + $0x1df] sm:$0xff]
        %v1487 = vld [vmem:[#allocation2 + $0x1e7] sm:$0xff]
        %v1488 = vld [vmem:[#allocation2 + $0x1ef] sm:$0xff]
        %v1489 = vld [vmem:[#allocation2 + $0x1f7] sm:$0xff]
        %v1490 = vld [vmem:[#allocation2 + $0x1b7] sm:$0xff]
        %v1491 = vmax.f32 %v1442, %v1450
        %v1492 = vmax.f32 %v1443, %v1451
        %v1493 = vmax.f32 %v1444, %v1452
        %v1494 = vmax.f32 %v1445, %v1453
        %v1495 = vmax.f32 %v1446, %v1454
        %v1496 = vmax.f32 %v1447, %v1455
        %v1497 = vmax.f32 %v1448, %v1456
        %v1498 = vmax.f32 %v1449, %v1457
        %v1499 = vmax.f32 %v1458, %v1466
        %v1500 = vmax.f32 %v1459, %v1467
        %v1501 = vmax.f32 %v1460, %v1468
        %v1502 = vmax.f32 %v1461, %v1469
        %v1503 = vmax.f32 %v1462, %v1470
        %v1504 = vmax.f32 %v1463, %v1471
        %v1505 = vmax.f32 %v1464, %v1472
        %v1506 = vmax.f32 %v1465, %v1473
        %v1507 = vmax.f32 %v1491, %v1499
        %v1508 = vmax.f32 %v1492, %v1500
        %v1509 = vmax.f32 %v1493, %v1501
        %v1510 = vmax.f32 %v1494, %v1502
        %v1511 = vmax.f32 %v1495, %v1503
        %v1512 = vmax.f32 %v1496, %v1504
        %v1513 = vmax.f32 %v1497, %v1505
        %v1514 = vmax.f32 %v1498, %v1506
        %v1515 = vsel %vm1201, %v1442, %v1474
        %v1516 = vsel %vm1202, %v1443, %v1475
        %v1517 = vsel %vm1203, %v1444, %v1476
        %v1518 = vsel %vm1204, %v1445, %v1477
        %v1519 = vsel %vm1205, %v1446, %v1478
        %v1520 = vsel %vm1206, %v1447, %v1479
        %v1521 = vsel %vm1207, %v1448, %v1480
        %v1522 = vsel %vm1208, %v1449, %v1481
        %v1523 = vmax.f32 %v1507, %v1515
        %v1524 = vmax.f32 %v1508, %v1516
        %v1525 = vmax.f32 %v1509, %v1517
        %v1526 = vmax.f32 %v1510, %v1518
        %v1527 = vmax.f32 %v1511, %v1519
        %v1528 = vmax.f32 %v1512, %v1520
        %v1529 = vmax.f32 %v1513, %v1521
        %v1530 = vmax.f32 %v1514, %v1522
        %v1531 = vsel %vm1201, %v1442, %v1482
        %v1532 = vsel %vm1202, %v1443, %v1483
        %v1533 = vsel %vm1203, %v1444, %v1484
        %v1534 = vsel %vm1204, %v1445, %v1485
        %v1535 = vsel %vm1205, %v1446, %v1486
        %v1536 = vsel %vm1206, %v1447, %v1487
        %v1537 = vsel %vm1207, %v1448, %v1488
        %v1538 = vsel %vm1208, %v1449, %v1489
        %v1539 = vmax.f32 %v1523, %v1531
        %v1540 = vmax.f32 %v1524, %v1532
        %v1541 = vmax.f32 %v1525, %v1533
        %v1542 = vmax.f32 %v1526, %v1534
        %v1543 = vmax.f32 %v1527, %v1535
        %v1544 = vmax.f32 %v1528, %v1536
        %v1545 = vmax.f32 %v1529, %v1537
        %v1546 = vmax.f32 %v1530, %v1538
        %v1547 = vsel %vm1241, %v1442, %v1457
        %v1548 = vsel %vm1242, %v1443, %v1458
        %v1549 = vsel %vm1243, %v1444, %v1459
        %v1550 = vsel %vm1244, %v1445, %v1460
        %v1551 = vsel %vm1245, %v1446, %v1461
        %v1552 = vsel %vm1246, %v1447, %v1462
        %v1553 = vsel %vm1247, %v1448, %v1463
        %v1554 = vsel %vm1248, %v1449, %v1464
        %v1555 = vmax.f32 %v1539, %v1547
        %v1556 = vmax.f32 %v1540, %v1548
        %v1557 = vmax.f32 %v1541, %v1549
        %v1558 = vmax.f32 %v1542, %v1550
        %v1559 = vmax.f32 %v1543, %v1551
        %v1560 = vmax.f32 %v1544, %v1552
        %v1561 = vmax.f32 %v1545, %v1553
        %v1562 = vmax.f32 %v1546, %v1554
        %v1563 = vsel %vm1241, %v1442, %v1465
        %v1564 = vsel %vm1242, %v1443, %v1466
        %v1565 = vsel %vm1243, %v1444, %v1467
        %v1566 = vsel %vm1244, %v1445, %v1468
        %v1567 = vsel %vm1245, %v1446, %v1469
        %v1568 = vsel %vm1246, %v1447, %v1470
        %v1569 = vsel %vm1247, %v1448, %v1471
        %v1570 = vsel %vm1248, %v1449, %v1472
        %v1571 = vmax.f32 %v1555, %v1563
        %v1572 = vmax.f32 %v1556, %v1564
        %v1573 = vmax.f32 %v1557, %v1565
        %v1574 = vmax.f32 %v1558, %v1566
        %v1575 = vmax.f32 %v1559, %v1567
        %v1576 = vmax.f32 %v1560, %v1568
        %v1577 = vmax.f32 %v1561, %v1569
        %v1578 = vmax.f32 %v1562, %v1570
        %v1579 = vsel %vm1249, %v1442, %v1490
        %v1580 = vsel %vm1250, %v1443, %v1482
        %v1581 = vsel %vm1251, %v1444, %v1483
        %v1582 = vsel %vm1252, %v1445, %v1484
        %v1583 = vsel %vm1253, %v1446, %v1485
        %v1584 = vsel %vm1254, %v1447, %v1486
        %v1585 = vsel %vm1255, %v1448, %v1487
        %v1586 = vsel %vm1256, %v1449, %v1488
        %v1587 = vmax.f32 %v1571, %v1579
        %v1588 = vmax.f32 %v1572, %v1580
        %v1589 = vmax.f32 %v1573, %v1581
        %v1590 = vmax.f32 %v1574, %v1582
        %v1591 = vmax.f32 %v1575, %v1583
        %v1592 = vmax.f32 %v1576, %v1584
        %v1593 = vmax.f32 %v1577, %v1585
        %v1594 = vmax.f32 %v1578, %v1586
        %v1595 = vadd.f32 %v1442, %v1450
        %v1596 = vadd.f32 %v1443, %v1451
        %v1597 = vadd.f32 %v1444, %v1452
        %v1598 = vadd.f32 %v1445, %v1453
        %v1599 = vadd.f32 %v1446, %v1454
        %v1600 = vadd.f32 %v1447, %v1455
        %v1601 = vadd.f32 %v1448, %v1456
        %v1602 = vadd.f32 %v1449, %v1457
        %v1603 = vadd.f32 %v1595, %v1458
        %v1604 = vadd.f32 %v1596, %v1459
        %v1605 = vadd.f32 %v1597, %v1460
        %v1606 = vadd.f32 %v1598, %v1461
        %v1607 = vadd.f32 %v1599, %v1462
        %v1608 = vadd.f32 %v1600, %v1463
        %v1609 = vadd.f32 %v1601, %v1464
        %v1610 = vadd.f32 %v1602, %v1465
        %v1611 = vadd.f32 %v1603, %v1466
        %v1612 = vadd.f32 %v1604, %v1467
        %v1613 = vadd.f32 %v1605, %v1468
        %v1614 = vadd.f32 %v1606, %v1469
        %v1615 = vadd.f32 %v1607, %v1470
        %v1616 = vadd.f32 %v1608, %v1471
        %v1617 = vadd.f32 %v1609, %v1472
        %v1618 = vadd.f32 %v1610, %v1473
        %v1619 = vsel %vm1201, 0.0, %v1474
        %v1620 = vsel %vm1202, 0.0, %v1475
        %v1621 = vsel %vm1203, 0.0, %v1476
        %v1622 = vsel %vm1204, 0.0, %v1477
        %v1623 = vsel %vm1205, 0.0, %v1478
        %v1624 = vsel %vm1206, 0.0, %v1479
        %v1625 = vsel %vm1207, 0.0, %v1480
        %v1626 = vsel %vm1208, 0.0, %v1481
        %v1627 = vadd.f32 %v1611, %v1619
        %v1628 = vadd.f32 %v1612, %v1620
        %v1629 = vadd.f32 %v1613, %v1621
        %v1630 = vadd.f32 %v1614, %v1622
        %v1631 = vadd.f32 %v1615, %v1623
        %v1632 = vadd.f32 %v1616, %v1624
        %v1633 = vadd.f32 %v1617, %v1625
        %v1634 = vadd.f32 %v1618, %v1626
        %v1635 = vsel %vm1201, 0.0, %v1482
        %v1636 = vsel %vm1202, 0.0, %v1483
        %v1637 = vsel %vm1203, 0.0, %v1484
        %v1638 = vsel %vm1204, 0.0, %v1485
        %v1639 = vsel %vm1205, 0.0, %v1486
        %v1640 = vsel %vm1206, 0.0, %v1487
        %v1641 = vsel %vm1207, 0.0, %v1488
        %v1642 = vsel %vm1208, 0.0, %v1489
        %v1643 = vadd.f32 %v1627, %v1635
        %v1644 = vadd.f32 %v1628, %v1636
        %v1645 = vadd.f32 %v1629, %v1637
        %v1646 = vadd.f32 %v1630, %v1638
        %v1647 = vadd.f32 %v1631, %v1639
        %v1648 = vadd.f32 %v1632, %v1640
        %v1649 = vadd.f32 %v1633, %v1641
        %v1650 = vadd.f32 %v1634, %v1642
        %v1651 = vsel %vm1241, 0.0, %v1457
        %v1652 = vsel %vm1242, 0.0, %v1458
        %v1653 = vsel %vm1243, 0.0, %v1459
        %v1654 = vsel %vm1244, 0.0, %v1460
        %v1655 = vsel %vm1245, 0.0, %v1461
        %v1656 = vsel %vm1246, 0.0, %v1462
        %v1657 = vsel %vm1247, 0.0, %v1463
        %v1658 = vsel %vm1248, 0.0, %v1464
        %v1659 = vadd.f32 %v1643, %v1651
        %v1660 = vadd.f32 %v1644, %v1652
        %v1661 = vadd.f32 %v1645, %v1653
        %v1662 = vadd.f32 %v1646, %v1654
        %v1663 = vadd.f32 %v1647, %v1655
        %v1664 = vadd.f32 %v1648, %v1656
        %v1665 = vadd.f32 %v1649, %v1657
        %v1666 = vadd.f32 %v1650, %v1658
        %v1667 = vsel %vm1241, 0.0, %v1465
        %v1668 = vsel %vm1242, 0.0, %v1466
        %v1669 = vsel %vm1243, 0.0, %v1467
        %v1670 = vsel %vm1244, 0.0, %v1468
        %v1671 = vsel %vm1245, 0.0, %v1469
        %v1672 = vsel %vm1246, 0.0, %v1470
        %v1673 = vsel %vm1247, 0.0, %v1471
        %v1674 = vsel %vm1248, 0.0, %v1472
        %v1675 = vadd.f32 %v1659, %v1667
        %v1676 = vadd.f32 %v1660, %v1668
        %v1677 = vadd.f32 %v1661, %v1669
        %v1678 = vadd.f32 %v1662, %v1670
        %v1679 = vadd.f32 %v1663, %v1671
        %v1680 = vadd.f32 %v1664, %v1672
        %v1681 = vadd.f32 %v1665, %v1673
        %v1682 = vadd.f32 %v1666, %v1674
        %v1683 = vsel %vm1249, 0.0, %v1490
        %v1684 = vsel %vm1250, 0.0, %v1482
        %v1685 = vsel %vm1251, 0.0, %v1483
        %v1686 = vsel %vm1252, 0.0, %v1484
        %v1687 = vsel %vm1253, 0.0, %v1485
        %v1688 = vsel %vm1254, 0.0, %v1486
        %v1689 = vsel %vm1255, 0.0, %v1487
        %v1690 = vsel %vm1256, 0.0, %v1488
        %v1691 = vadd.f32 %v1675, %v1683
        %v1692 = vadd.f32 %v1676, %v1684
        %v1693 = vadd.f32 %v1677, %v1685
        %v1694 = vadd.f32 %v1678, %v1686
        %v1695 = vadd.f32 %v1679, %v1687
        %v1696 = vadd.f32 %v1680, %v1688
        %v1697 = vadd.f32 %v1681, %v1689
        %v1698 = vadd.f32 %v1682, %v1690
        %v1699 = vmul.f32 %v1691, %v1259
        %v1700 = vmul.f32 %v1692, %v1263
        %v1701 = vmul.f32 %v1693, %v1267
        %v1702 = vmul.f32 %v1694, %v1271
        %v1703 = vmul.f32 %v1695, %v1275
        %v1704 = vmul.f32 %v1696, %v1279
        %v1705 = vmul.f32 %v1697, %v1283
        %v1706 = vmul.f32 %v1698, %v1287
        %v1707 = vadd.f32 %v1434, %v1699
        %v1708 = vadd.f32 %v1435, %v1700
        %v1709 = vadd.f32 %v1436, %v1701
        %v1710 = vadd.f32 %v1437, %v1702
        %v1711 = vadd.f32 %v1438, %v1703
        %v1712 = vadd.f32 %v1439, %v1704
        %v1713 = vadd.f32 %v1440, %v1705
        %v1714 = vadd.f32 %v1441, %v1706
        %v1715 = vadd.f32 %v1707, %v1587
        %v1716 = vadd.f32 %v1708, %v1588
        %v1717 = vadd.f32 %v1709, %v1589
        %v1718 = vadd.f32 %v1710, %v1590
        %v1719 = vadd.f32 %v1711, %v1591
        %v1720 = vadd.f32 %v1712, %v1592
        %v1721 = vadd.f32 %v1713, %v1593
        %v1722 = vadd.f32 %v1714, %v1594
        %1731 = vrot.lane.b32.xlu0 %v1715, 8
        %v1732 = vpop.permute.xlu0 %1731
        %1733 = vrot.lane.b32.xlu0 %v1716, 8
        %v1734 = vpop.permute.xlu0 %1733
        %1735 = vrot.lane.b32.xlu0 %v1717, 8
        %v1736 = vpop.permute.xlu0 %1735
        %1737 = vrot.lane.b32.xlu0 %v1718, 8
        %v1738 = vpop.permute.xlu0 %1737
        %1739 = vrot.lane.b32.xlu0 %v1719, 8
        %v1740 = vpop.permute.xlu0 %1739
        %1741 = vrot.lane.b32.xlu0 %v1720, 8
        %v1742 = vpop.permute.xlu0 %1741
        %1743 = vrot.lane.b32.xlu0 %v1721, 8
        %v1744 = vpop.permute.xlu0 %1743
        %1745 = vrot.lane.b32.xlu0 %v1722, 8
        %v1746 = vpop.permute.xlu0 %1745
        %v1755 = vsel %vm374, %v1707, %v1732
        %v1756 = vsel %vm374, %v1708, %v1734
        %v1757 = vsel %vm374, %v1709, %v1736
        %v1758 = vsel %vm374, %v1710, %v1738
        %v1759 = vsel %vm374, %v1711, %v1740
        %v1760 = vsel %vm374, %v1712, %v1742
        %v1761 = vsel %vm374, %v1713, %v1744
        %v1762 = vsel %vm374, %v1714, %v1746
        %vm1763 = vcmask 130048
        %1764 = vst.msk [vmem:[%s288] sm:$0xff] %vm1763, %v1755
        %1765 = vst.msk [vmem:[%s288 + $0x8] sm:$0xff] %vm1763, %v1756
        %1766 = vst.msk [vmem:[%s288 + $0x10] sm:$0xff] %vm1763, %v1757
        %1767 = vst.msk [vmem:[%s288 + $0x18] sm:$0xff] %vm1763, %v1758
        %1768 = vst.msk [vmem:[%s288 + $0x20] sm:$0xff] %vm1763, %v1759
        %1769 = vst.msk [vmem:[%s288 + $0x28] sm:$0xff] %vm1763, %v1760
        %1770 = vst.msk [vmem:[%s288 + $0x30] sm:$0xff] %vm1763, %v1761
        %1771 = vst.msk [vmem:[%s288 + $0x38] sm:$0xff] %vm1763, %v1762
        %s1772 = sand.u32 %s186, 1
        %s1773 = scalar_lea.sflag [#allocation4], %s1772
        %s1774 = sand.u32 %s186, 1
        %s1775 = smul.addr %s1774, 64
        %s1776 = scalar_lea.vmem [#allocation3], %s1775
        // Predicated region
        $region49: #{_unnamed_function_.1} parent=47 // pred_check
          %p1777 = pneg %p196
        $region50: #{_unnamed_function_.1} parent=47 // pred_check_branch
          %1779 = sbr.rel (%p1777) target = $region52
        $region51: #{_unnamed_function_.1} parent=47 // pred_region
          %s1780 = smul.u32 8, %s21
          %s1782 = ssub.s32 1024, 1024
          %1783 = vsyncadd %s1773, %s1782
          %s1784 = smul.addr %s1780, 128
          %s1785 = scalar_lea.hbm %s7, %s1784
          %s1786 = sshll.u32 %s1776, 4
          %s1787 = int_to_ptr.vmem [resolvable:$true] %s1786
          %1792 = dma.vmem_to_hbm [thread:$0]  %s1787, 1024, %s1785, %s1773, 128, 128, 8
        $region52: #{_unnamed_function_.1} parent=47 // pred_fallthru
          _
      $region48: #{_unnamed_function_.1} parent=5 // pred_fallthru
        _
      %p1793 = scmp.le.s32.totalorder 2, %s16
      // Predicated region
      $region53: #{_unnamed_function_.1} parent=5 // pred_check
        %p1794 = pneg %p1793
      $region54: #{_unnamed_function_.1} parent=5 // pred_check_branch
        %1796 = sbr.rel (%p1794) target = $region56
      $region55: #{_unnamed_function_.1} parent=5 // pred_region
        %s1797 = ssub.s32 %s16, 2
        // Predicated region
        $region57: #{_unnamed_function_.1} parent=55 // pred_check
          %p1798 = pneg %p202
        $region58: #{_unnamed_function_.1} parent=55 // pred_check_branch
          %1800 = sbr.rel (%p1798) target = $region60
        $region59: #{_unnamed_function_.1} parent=55 // pred_region
          %s1801 = sand.u32 %s187, 1
          %s1802 = scalar_lea.sflag [#allocation4], %s1801
          %s1803 = sand.u32 %s187, 1
          %s1804 = smul.addr %s1803, 64
          %s1805 = scalar_lea.vmem [#allocation3], %s1804
          %1806 = dma.done %s1802, 1024
        $region60: #{_unnamed_function_.1} parent=55 // pred_fallthru
          _
      $region56: #{_unnamed_function_.1} parent=5 // pred_fallthru
        _
    $region6: #{_unnamed_function_.1} parent=1 // loop_footer
      %s20 = sadd.s32 1, %s16
    $region7: #{_unnamed_function_.1} parent=1 // loop_footer_branch
      %15 = sbr.rel target = $region3
    $region8: #{_unnamed_function_.1} parent=1 // loop_exit
      _
    %1807 = vsyncpa [#allocation4], 1
    %s1808 = scalar_lea.sflag [#allocation4], 1
    %1809 = vsyncpa %s1808, 1

</llo_original>
